<compile_context>
chip_gen: v7x
topology: tpu7x:2x2x1
jax: 0.10.0
libtpu: 0.0.40
codegen_flags: <defaults>
</compile_context>

<pallas_src>
import math

import jax
import jax.numpy as jnp
from jax.experimental import pallas as pl
from jax.experimental.pallas import tpu as pltpu


# Concatenated fixed temporal table layout: [month(13) | day(32) | weekday(7) | hour(24)].
_TABLE_SIZES = (13, 32, 7, 24)
_TABLE_OFFSETS = (0, 13, 45, 52)   # x_mark column order: month, day, weekday, hour
_N_TABLE = sum(_TABLE_SIZES)       # 76
# TODO(synk): freq='t' (minute embedding) branch is not implemented; this covers freq='h'.


# ----------------------------- Pallas kernel ---------------------------------
def data_embedding_kernel(x_ref, mark_ref, pe_ref, w_ref, table_ref, o_ref):
    """One grid step = `tb` whole sequences.

    x_ref:     (tb, L, C)  bf16   raw values (per-step streamed block)
    mark_ref:  (tb, L, 4)  int32  time marks, pre-offset into the concatenated table
    pe_ref:    (L, D)      f32    pe_fc(PositionalEmbedding)+bias — batch-invariant, resident
    w_ref:     (3, C, D)   f32    circular-conv taps [w(t-1), w(t), w(t+1)] — resident
    table_ref: (NT, D)     f32    concatenated fixed sinusoid tables — resident
    o_ref:     (tb, L, D)
    """
    tb, seq_len, _ = x_ref.shape
    n_tab = table_ref.shape[0]

    # Grid-invariant loads hoisted out of the per-sequence loop (JAX does not CSE broadcasts).
    w_prev = w_ref[0]
    w_mid = w_ref[1]
    w_next = w_ref[2]
    table = table_ref[...]
    pe = pe_ref[...]
    ids = jax.lax.broadcasted_iota(jnp.int32, (seq_len, n_tab), 1)

    # Static unroll over the (capped, small) number of sequences in this block: keeps the
    # circular shift a plain 2-D sublane rotate and the pe add broadcast-free. The kernel is
    # HBM-bound, so the smaller per-sequence matmuls cost nothing.
    for t in range(tb):
        # TokenEmbedding: circular k=3 Conv1d. out[l] = w0 @ x[l-1] + w1 @ x[l] + w2 @ x[l+1]
        # with wrap-around. Shifts are positive-shift sublane rolls (XLU slot, otherwise idle).
        x = x_ref[t].astype(jnp.float32)                     # (L, C) — cast once, roll in f32
        x_prev = pltpu.roll(x, shift=1, axis=0)              # x[l-1]
        x_next = pltpu.roll(x, shift=seq_len - 1, axis=0)    # x[l+1] (positive shift only)
        value = (
            jnp.dot(x_prev, w_prev, preferred_element_type=jnp.float32)
            + jnp.dot(x, w_mid, preferred_element_type=jnp.float32)
            + jnp.dot(x_next, w_next, preferred_element_type=jnp.float32)
        )                                                    # (L, D) f32

        # TemporalEmbedding: 4 fixed-table gathers as ONE multi-hot matmul (lookup stays in
        # VMEM; no (B,L,D) temporal tensor from HBM). Per-field index ranges are disjoint after
        # offsetting, so OR-ing the integer compares + a single cast is exact (one convert
        # instead of four f32 casts). Out-of-range marks contribute 0 (validate upstream).
        # Set precision=HIGHEST on this dot if exact-gather fidelity is ever needed.
        m = mark_ref[t]                                      # (L, 4) int32
        hot = (
            (m[:, 0:1] == ids)
            | (m[:, 1:2] == ids)
            | (m[:, 2:3] == ids)
            | (m[:, 3:4] == ids)
        )
        temporal = jnp.dot(hot.astype(table.dtype), table,
                           preferred_element_type=jnp.float32)   # (L, D) f32

        # dropout(p=0.1) is identity in eval mode; pe is batch-invariant (added un-tiled).
        o_ref[t] = (value + temporal + pe).astype(o_ref.dtype)


# ----------------------------- helpers ----------------------------------------
def sinusoid_table(n_pos, d_model):
    """Matches PositionalEmbedding / FixedEmbedding buffer construction."""
    pos = jnp.arange(n_pos, dtype=jnp.float32)[:, None]
    div = jnp.exp(
        jnp.arange(0, d_model, 2, dtype=jnp.float32) * -(math.log(10000.0) / d_model)
    )
    tab = jnp.zeros((n_pos, d_model), dtype=jnp.float32)
    tab = tab.at[:, 0::2].set(jnp.sin(pos * div))
    tab = tab.at[:, 1::2].set(jnp.cos(pos * div))
    return tab


def _padded_tile_bytes(shape, dtype):
    """VMEM footprint of one tile, counting (sublane, lane) = (8, 128) layout padding."""
    item = jnp.dtype(dtype).itemsize
    lead = 1
    for s in shape[:-2]:
        lead *= int(s)
    sub = -(-int(shape[-2]) // 8) * 8
    lane = -(-int(shape[-1]) // 128) * 128
    return lead * sub * lane * item


def _pick_batch_tile(batch, seq_len, rows_per_block):
    """Sequences per grid step: ~rows_per_block rows, never splitting a sequence, divisor of B.

    The cap of 32 bounds the static unroll inside the kernel body.
    """
    tb = max(1, min(batch, rows_per_block // max(seq_len, 1), 32))
    while batch % tb:
        tb -= 1
    return tb


# ----------------------------- forward wrapper ---------------------------------
def data_embedding_forward(x, x_mark, w_conv, w_fc, b_fc, *,
                           rows_per_block=1024, out_dtype=jnp.float32):
    """DataEmbedding forward. w_conv has torch Conv1d layout (d_model, c_in, 3)."""
    B, L, C = x.shape
    D = w_conv.shape[0]
    assert L % 8 == 0, "sequence length must be a sublane multiple (for the circular roll)"

    tb = _pick_batch_tile(B, L, rows_per_block)
    grid = (B // tb,)

    # ---- batch-invariant precompute, hoisted out of the grid loop ----
    # Conv taps reordered to (tap, c_in, d_model) so the kernel reads (C, D) operands directly.
    w_taps = jnp.transpose(w_conv, (2, 1, 0)).astype(jnp.float32)                 # (3, C, D)
    temp_table = jnp.concatenate(
        [sinusoid_table(n, D) for n in _TABLE_SIZES], axis=0)                     # (76, D)
    # pe_fc projection is batch-invariant: computed once, passed as a single (L, D) resident
    # block and broadcast inside the kernel (no tb-fold duplication in HBM or VMEM).
    pe_proj = sinusoid_table(L, D) @ w_fc.T + b_fc[None, :]                       # (L, D) f32

    # ---- streamed operands: bf16 values, int32 marks offset into the concatenated table ----
    x_stream = x.astype(jnp.bfloat16)
    offsets = jnp.array(_TABLE_OFFSETS, jnp.int32)
    marks = x_mark.astype(jnp.int32) + offsets[None, None, :]                     # (B, L, 4)

    # ---- explicit VMEM budget: double-buffered per-step blocks + resident operands ----
    block_bytes = (_padded_tile_bytes((tb, L, C), jnp.bfloat16)
                   + _padded_tile_bytes((tb, L, 4), jnp.int32)
                   + _padded_tile_bytes((tb, L, D), out_dtype))
    resident_bytes = (_padded_tile_bytes((L, D), jnp.float32)
                      + _padded_tile_bytes((3, C, D), jnp.float32)
                      + _padded_tile_bytes((_N_TABLE, D), jnp.float32))
    vmem_needed = 2 * (block_bytes + resident_bytes)
    # Generous headroom, but never above v7x's 64 MiB physical VMEM.
    vmem_limit = int(min(max(4 * vmem_needed, 32 << 20), 64 << 20))

    flops = 2 * B * L * (3 * C + _N_TABLE) * D
    bytes_accessed = (x_stream.size * 2 + marks.size * 4
                      + (pe_proj.size + w_taps.size + temp_table.size) * 4
                      + B * L * D * jnp.dtype(out_dtype).itemsize)

    out = pl.pallas_call(
        data_embedding_kernel,
        out_shape=jax.ShapeDtypeStruct((B, L, D), out_dtype),
        grid=grid,
        in_specs=[
            pl.BlockSpec((tb, L, C), lambda i: (i, 0, 0)),
            pl.BlockSpec((tb, L, 4), lambda i: (i, 0, 0)),
            # Grid-invariant blocks (constant index maps): fetched once, VMEM resident.
            # (pipeline_mode=pl.Buffered(1) would drop their spare pipeline buffer; skipped
            #  for API portability — they are small relative to the streamed blocks.)
            pl.BlockSpec((L, D), lambda i: (0, 0)),
            pl.BlockSpec((3, C, D), lambda i: (0, 0, 0)),
            pl.BlockSpec((_N_TABLE, D), lambda i: (0, 0)),
        ],
        out_specs=pl.BlockSpec((tb, L, D), lambda i: (i, 0, 0)),
        compiler_params=pltpu.CompilerParams(
            dimension_semantics=("parallel",),
            vmem_limit_bytes=vmem_limit,
        ),
        cost_estimate=pl.CostEstimate(
            flops=flops, transcendentals=0, bytes_accessed=bytes_accessed),
    )(x_stream, marks, pe_proj, w_taps, temp_table)
    return out


# ----------------------------- parameter setup ---------------------------------
def make_params(key, c_in, d_model):
    k_conv, k_w, k_b = jax.random.split(key, 3)
    # TokenEmbedding conv weight: torch shape (d_model, c_in, 3), kaiming_normal fan_in/leaky_relu
    fan_in = c_in * 3
    gain = math.sqrt(2.0 / (1.0 + 0.01 ** 2))
    std = gain / math.sqrt(fan_in)
    w_conv = jax.random.normal(k_conv, (d_model, c_in, 3), jnp.float32) * std
    # pe_fc Linear(d_model, d_model): uniform(-1/sqrt(D), 1/sqrt(D))
    bound = 1.0 / math.sqrt(d_model)
    w_fc = jax.random.uniform(k_w, (d_model, d_model), jnp.float32, -bound, bound)
    b_fc = jax.random.uniform(k_b, (d_model,), jnp.float32, -bound, bound)
    return w_conv, w_fc, b_fc


# ----------------------------- pure-JAX reference ------------------------------
def data_embedding_ref(x, x_mark, w_conv, w_fc, b_fc):
    B, L, C = x.shape
    D = w_conv.shape[0]
    x_prev = jnp.roll(x, 1, axis=1)
    x_next = jnp.roll(x, -1, axis=1)
    value = (
        jnp.einsum("blc,dc->bld", x_prev, w_conv[:, :, 0])
        + jnp.einsum("blc,dc->bld", x, w_conv[:, :, 1])
        + jnp.einsum("blc,dc->bld", x_next, w_conv[:, :, 2])
    )
    month_t, day_t, wd_t, hour_t = (sinusoid_table(n, D) for n in _TABLE_SIZES)
    xm = x_mark.astype(jnp.int32)
    temporal = hour_t[xm[..., 3]] + wd_t[xm[..., 2]] + day_t[xm[..., 1]] + month_t[xm[..., 0]]
    pe_proj = sinusoid_table(L, D) @ w_fc.T + b_fc[None, :]
    return value + temporal + pe_proj[None]


if __name__ == "__main__":
    # Small demo shapes: d_model=128 keeps the output lane-dense; rows_per_block=128 gives
    # tb=4 sequences/step -> a 2-step grid (even step count, shardable on v7x megacore).
    B, L, C_IN, D_MODEL = 8, 32, 7, 128

    key = jax.random.PRNGKey(0)
    k_x, k_mark, k_param = jax.random.split(key, 3)

    x = jax.random.normal(k_x, (B, L, C_IN), jnp.float32)
    # x_mark columns (freq='h'): [month(0..12), day(0..31), weekday(0..6), hour(0..23)]
    maxes = jnp.array([13, 32, 7, 24], jnp.int32)
    x_mark = jax.random.randint(k_mark, (B, L, 4), 0, 10_000, jnp.int32) % maxes

    w_conv, w_fc, b_fc = make_params(k_param, C_IN, D_MODEL)

    out = data_embedding_forward(x, x_mark, w_conv, w_fc, b_fc, rows_per_block=128)
    out = jax.block_until_ready(out)

    ref = data_embedding_ref(x, x_mark, w_conv, w_fc, b_fc)
    assert out.shape == (B, L, D_MODEL)
    # Tolerance covers bf16 streaming of x and default (bf16-pass) MXU precision for the fused
    # in-kernel matmuls vs the f32 gather/einsum reference decomposition.
    assert jnp.allclose(out, ref, rtol=3e-2, atol=3e-2), "mismatch vs reference"

    print("KERNEL_OK")
</pallas_src>

<mosaic_0001>
module attributes {stable_mosaic.version = 11 : i64} {
  func.func @data_embedding_kernel(%arg0: i32, %arg1: memref<4x32x7xbf16, #tpu.memory_space<vmem>>, %arg2: memref<4x32x4xi32, #tpu.memory_space<vmem>>, %arg3: memref<32x128xf32, #tpu.memory_space<vmem>>, %arg4: memref<3x7x128xf32, #tpu.memory_space<vmem>>, %arg5: memref<76x128xf32, #tpu.memory_space<vmem>>, %arg6: memref<4x32x128xf32, #tpu.memory_space<vmem>>) attributes {dimension_semantics = [#tpu.dimension_semantics<parallel>], iteration_bounds = array<i64: 2>, scalar_prefetch = 0 : i64, scratch_operands = 0 : i64, tpu.core_type = #tpu.core_type<tc>, window_params = [{transform_indices = @transform_0, window_bounds = array<i64: 4, 32, 7>}, {transform_indices = @transform_1, window_bounds = array<i64: 4, 32, 4>}, {pipeline_mode = #tpu.pipeline_mode<synchronous>, transform_indices = @transform_2, window_bounds = array<i64: 32, 128>}, {pipeline_mode = #tpu.pipeline_mode<synchronous>, transform_indices = @transform_3, window_bounds = array<i64: 3, 7, 128>}, {pipeline_mode = #tpu.pipeline_mode<synchronous>, transform_indices = @transform_4, window_bounds = array<i64: 76, 128>}, {transform_indices = @transform_5, window_bounds = array<i64: 4, 32, 128>}]} {
    %c0 = arith.constant 0 : index
    %c0_0 = arith.constant 0 : index
    %c0_1 = arith.constant 0 : index
    %0 = vector.load %arg4[%c0, %c0_0, %c0_1] : memref<3x7x128xf32, #tpu.memory_space<vmem>>, vector<1x7x128xf32>
    %1 = vector.shape_cast %0 : vector<1x7x128xf32> to vector<7x128xf32>
    %c1 = arith.constant 1 : index
    %c0_2 = arith.constant 0 : index
    %c0_3 = arith.constant 0 : index
    %2 = vector.load %arg4[%c1, %c0_2, %c0_3] : memref<3x7x128xf32, #tpu.memory_space<vmem>>, vector<1x7x128xf32>
    %3 = vector.shape_cast %2 : vector<1x7x128xf32> to vector<7x128xf32>
    %c2 = arith.constant 2 : index
    %c0_4 = arith.constant 0 : index
    %c0_5 = arith.constant 0 : index
    %4 = vector.load %arg4[%c2, %c0_4, %c0_5] : memref<3x7x128xf32, #tpu.memory_space<vmem>>, vector<1x7x128xf32>
    %5 = vector.shape_cast %4 : vector<1x7x128xf32> to vector<7x128xf32>
    %c0_6 = arith.constant 0 : index
    %c0_7 = arith.constant 0 : index
    %6 = vector.load %arg5[%c0_6, %c0_7] : memref<76x128xf32, #tpu.memory_space<vmem>>, vector<76x128xf32>
    %c0_8 = arith.constant 0 : index
    %c0_9 = arith.constant 0 : index
    %7 = vector.load %arg3[%c0_8, %c0_9] : memref<32x128xf32, #tpu.memory_space<vmem>>, vector<32x128xf32>
    %8 = tpu.iota {dimensions = array<i32: 1>} : vector<32x76xi32>
    %c0_10 = arith.constant 0 : index
    %c0_11 = arith.constant 0 : index
    %c0_12 = arith.constant 0 : index
    %9 = vector.load %arg1[%c0_10, %c0_11, %c0_12] : memref<4x32x7xbf16, #tpu.memory_space<vmem>>, vector<1x32x7xbf16>
    %10 = vector.shape_cast %9 : vector<1x32x7xbf16> to vector<32x7xbf16>
    %11 = arith.extf %10 : vector<32x7xbf16> to vector<32x7xf32>
    %c1_i32 = arith.constant 1 : i32
    %12 = tpu.dynamic_rotate %11 by %c1_i32 dim 0 : vector<32x7xf32>, i32 -> vector<32x7xf32>
    %c31_i32 = arith.constant 31 : i32
    %13 = tpu.dynamic_rotate %11 by %c31_i32 dim 0 : vector<32x7xf32>, i32 -> vector<32x7xf32>
    %cst = arith.constant dense<0.000000e+00> : vector<32x128xf32>
    %14 = tpu.matmul %12, %1, %cst {dimension_numbers = #tpu.dot_dimension_numbers<[1], [0], [0], [1], [0, 0, 1, 1], [], []>} : vector<32x7xf32>, vector<7x128xf32>, vector<32x128xf32> -> vector<32x128xf32>
    %cst_13 = arith.constant dense<0.000000e+00> : vector<32x128xf32>
    %15 = tpu.matmul %11, %3, %cst_13 {dimension_numbers = #tpu.dot_dimension_numbers<[1], [0], [0], [1], [0, 0, 1, 1], [], []>} : vector<32x7xf32>, vector<7x128xf32>, vector<32x128xf32> -> vector<32x128xf32>
    %16 = arith.addf %14, %15 : vector<32x128xf32>
    %cst_14 = arith.constant dense<0.000000e+00> : vector<32x128xf32>
    %17 = tpu.matmul %13, %5, %cst_14 {dimension_numbers = #tpu.dot_dimension_numbers<[1], [0], [0], [1], [0, 0, 1, 1], [], []>} : vector<32x7xf32>, vector<7x128xf32>, vector<32x128xf32> -> vector<32x128xf32>
    %18 = arith.addf %16, %17 : vector<32x128xf32>
    %c0_15 = arith.constant 0 : index
    %c0_16 = arith.constant 0 : index
    %c0_17 = arith.constant 0 : index
    %19 = vector.load %arg2[%c0_15, %c0_16, %c0_17] : memref<4x32x4xi32, #tpu.memory_space<vmem>>, vector<1x32x4xi32>
    %20 = vector.shape_cast %19 : vector<1x32x4xi32> to vector<32x4xi32>
    %21 = vector.extract_strided_slice %20 {offsets = [0, 0], sizes = [32, 1], strides = [1, 1]} : vector<32x4xi32> to vector<32x1xi32>
    %22 = vector.broadcast %21 : vector<32x1xi32> to vector<32x76xi32>
    %23 = arith.cmpi eq, %22, %8 : vector<32x76xi32>
    %24 = vector.extract_strided_slice %20 {offsets = [0, 1], sizes = [32, 1], strides = [1, 1]} : vector<32x4xi32> to vector<32x1xi32>
    %25 = vector.broadcast %24 : vector<32x1xi32> to vector<32x76xi32>
    %26 = arith.cmpi eq, %25, %8 : vector<32x76xi32>
    %27 = arith.ori %23, %26 : vector<32x76xi1>
    %28 = vector.extract_strided_slice %20 {offsets = [0, 2], sizes = [32, 1], strides = [1, 1]} : vector<32x4xi32> to vector<32x1xi32>
    %29 = vector.broadcast %28 : vector<32x1xi32> to vector<32x76xi32>
    %30 = arith.cmpi eq, %29, %8 : vector<32x76xi32>
    %31 = arith.ori %27, %30 : vector<32x76xi1>
    %32 = vector.extract_strided_slice %20 {offsets = [0, 3], sizes = [32, 1], strides = [1, 1]} : vector<32x4xi32> to vector<32x1xi32>
    %33 = vector.broadcast %32 : vector<32x1xi32> to vector<32x76xi32>
    %34 = arith.cmpi eq, %33, %8 : vector<32x76xi32>
    %35 = arith.ori %31, %34 : vector<32x76xi1>
    %36 = arith.extui %35 : vector<32x76xi1> to vector<32x76xi32>
    %37 = arith.sitofp %36 : vector<32x76xi32> to vector<32x76xf32>
    %cst_18 = arith.constant dense<0.000000e+00> : vector<32x128xf32>
    %38 = tpu.matmul %37, %6, %cst_18 {dimension_numbers = #tpu.dot_dimension_numbers<[1], [0], [0], [1], [0, 0, 1, 1], [], []>} : vector<32x76xf32>, vector<76x128xf32>, vector<32x128xf32> -> vector<32x128xf32>
    %39 = arith.addf %18, %38 : vector<32x128xf32>
    %40 = arith.addf %39, %7 : vector<32x128xf32>
    %c0_19 = arith.constant 0 : index
    %c0_20 = arith.constant 0 : index
    %c0_21 = arith.constant 0 : index
    %41 = vector.load %arg6[%c0_19, %c0_20, %c0_21] : memref<4x32x128xf32, #tpu.memory_space<vmem>>, vector<1x32x128xf32>
    %42 = vector.shape_cast %41 : vector<1x32x128xf32> to vector<32x128xf32>
    %43 = vector.shape_cast %40 : vector<32x128xf32> to vector<1x32x128xf32>
    tpu.vector_store %arg6[%c0_19, %c0_20, %c0_21], %43 {strides = array<i32>} : memref<4x32x128xf32, #tpu.memory_space<vmem>>, vector<1x32x128xf32>,
    %c1_22 = arith.constant 1 : index
    %c0_23 = arith.constant 0 : index
    %c0_24 = arith.constant 0 : index
    %44 = vector.load %arg1[%c1_22, %c0_23, %c0_24] : memref<4x32x7xbf16, #tpu.memory_space<vmem>>, vector<1x32x7xbf16>
    %45 = vector.shape_cast %44 : vector<1x32x7xbf16> to vector<32x7xbf16>
    %46 = arith.extf %45 : vector<32x7xbf16> to vector<32x7xf32>
    %c1_i32_25 = arith.constant 1 : i32
    %47 = tpu.dynamic_rotate %46 by %c1_i32_25 dim 0 : vector<32x7xf32>, i32 -> vector<32x7xf32>
    %c31_i32_26 = arith.constant 31 : i32
    %48 = tpu.dynamic_rotate %46 by %c31_i32_26 dim 0 : vector<32x7xf32>, i32 -> vector<32x7xf32>
    %cst_27 = arith.constant dense<0.000000e+00> : vector<32x128xf32>
    %49 = tpu.matmul %47, %1, %cst_27 {dimension_numbers = #tpu.dot_dimension_numbers<[1], [0], [0], [1], [0, 0, 1, 1], [], []>} : vector<32x7xf32>, vector<7x128xf32>, vector<32x128xf32> -> vector<32x128xf32>
    %cst_28 = arith.constant dense<0.000000e+00> : vector<32x128xf32>
    %50 = tpu.matmul %46, %3, %cst_28 {dimension_numbers = #tpu.dot_dimension_numbers<[1], [0], [0], [1], [0, 0, 1, 1], [], []>} : vector<32x7xf32>, vector<7x128xf32>, vector<32x128xf32> -> vector<32x128xf32>
    %51 = arith.addf %49, %50 : vector<32x128xf32>
    %cst_29 = arith.constant dense<0.000000e+00> : vector<32x128xf32>
    %52 = tpu.matmul %48, %5, %cst_29 {dimension_numbers = #tpu.dot_dimension_numbers<[1], [0], [0], [1], [0, 0, 1, 1], [], []>} : vector<32x7xf32>, vector<7x128xf32>, vector<32x128xf32> -> vector<32x128xf32>
    %53 = arith.addf %51, %52 : vector<32x128xf32>
    %c1_30 = arith.constant 1 : index
    %c0_31 = arith.constant 0 : index
    %c0_32 = arith.constant 0 : index
    %54 = vector.load %arg2[%c1_30, %c0_31, %c0_32] : memref<4x32x4xi32, #tpu.memory_space<vmem>>, vector<1x32x4xi32>
    %55 = vector.shape_cast %54 : vector<1x32x4xi32> to vector<32x4xi32>
    %56 = vector.extract_strided_slice %55 {offsets = [0, 0], sizes = [32, 1], strides = [1, 1]} : vector<32x4xi32> to vector<32x1xi32>
    %57 = vector.broadcast %56 : vector<32x1xi32> to vector<32x76xi32>
    %58 = arith.cmpi eq, %57, %8 : vector<32x76xi32>
    %59 = vector.extract_strided_slice %55 {offsets = [0, 1], sizes = [32, 1], strides = [1, 1]} : vector<32x4xi32> to vector<32x1xi32>
    %60 = vector.broadcast %59 : vector<32x1xi32> to vector<32x76xi32>
    %61 = arith.cmpi eq, %60, %8 : vector<32x76xi32>
    %62 = arith.ori %58, %61 : vector<32x76xi1>
    %63 = vector.extract_strided_slice %55 {offsets = [0, 2], sizes = [32, 1], strides = [1, 1]} : vector<32x4xi32> to vector<32x1xi32>
    %64 = vector.broadcast %63 : vector<32x1xi32> to vector<32x76xi32>
    %65 = arith.cmpi eq, %64, %8 : vector<32x76xi32>
    %66 = arith.ori %62, %65 : vector<32x76xi1>
    %67 = vector.extract_strided_slice %55 {offsets = [0, 3], sizes = [32, 1], strides = [1, 1]} : vector<32x4xi32> to vector<32x1xi32>
    %68 = vector.broadcast %67 : vector<32x1xi32> to vector<32x76xi32>
    %69 = arith.cmpi eq, %68, %8 : vector<32x76xi32>
    %70 = arith.ori %66, %69 : vector<32x76xi1>
    %71 = arith.extui %70 : vector<32x76xi1> to vector<32x76xi32>
    %72 = arith.sitofp %71 : vector<32x76xi32> to vector<32x76xf32>
    %cst_33 = arith.constant dense<0.000000e+00> : vector<32x128xf32>
    %73 = tpu.matmul %72, %6, %cst_33 {dimension_numbers = #tpu.dot_dimension_numbers<[1], [0], [0], [1], [0, 0, 1, 1], [], []>} : vector<32x76xf32>, vector<76x128xf32>, vector<32x128xf32> -> vector<32x128xf32>
    %74 = arith.addf %53, %73 : vector<32x128xf32>
    %75 = arith.addf %74, %7 : vector<32x128xf32>
    %c1_34 = arith.constant 1 : index
    %c0_35 = arith.constant 0 : index
    %c0_36 = arith.constant 0 : index
    %76 = vector.load %arg6[%c1_34, %c0_35, %c0_36] : memref<4x32x128xf32, #tpu.memory_space<vmem>>, vector<1x32x128xf32>
    %77 = vector.shape_cast %76 : vector<1x32x128xf32> to vector<32x128xf32>
    %78 = vector.shape_cast %75 : vector<32x128xf32> to vector<1x32x128xf32>
    tpu.vector_store %arg6[%c1_34, %c0_35, %c0_36], %78 {strides = array<i32>} : memref<4x32x128xf32, #tpu.memory_space<vmem>>, vector<1x32x128xf32>,
    %c2_37 = arith.constant 2 : index
    %c0_38 = arith.constant 0 : index
    %c0_39 = arith.constant 0 : index
    %79 = vector.load %arg1[%c2_37, %c0_38, %c0_39] : memref<4x32x7xbf16, #tpu.memory_space<vmem>>, vector<1x32x7xbf16>
    %80 = vector.shape_cast %79 : vector<1x32x7xbf16> to vector<32x7xbf16>
    %81 = arith.extf %80 : vector<32x7xbf16> to vector<32x7xf32>
    %c1_i32_40 = arith.constant 1 : i32
    %82 = tpu.dynamic_rotate %81 by %c1_i32_40 dim 0 : vector<32x7xf32>, i32 -> vector<32x7xf32>
    %c31_i32_41 = arith.constant 31 : i32
    %83 = tpu.dynamic_rotate %81 by %c31_i32_41 dim 0 : vector<32x7xf32>, i32 -> vector<32x7xf32>
    %cst_42 = arith.constant dense<0.000000e+00> : vector<32x128xf32>
    %84 = tpu.matmul %82, %1, %cst_42 {dimension_numbers = #tpu.dot_dimension_numbers<[1], [0], [0], [1], [0, 0, 1, 1], [], []>} : vector<32x7xf32>, vector<7x128xf32>, vector<32x128xf32> -> vector<32x128xf32>
    %cst_43 = arith.constant dense<0.000000e+00> : vector<32x128xf32>
    %85 = tpu.matmul %81, %3, %cst_43 {dimension_numbers = #tpu.dot_dimension_numbers<[1], [0], [0], [1], [0, 0, 1, 1], [], []>} : vector<32x7xf32>, vector<7x128xf32>, vector<32x128xf32> -> vector<32x128xf32>
    %86 = arith.addf %84, %85 : vector<32x128xf32>
    %cst_44 = arith.constant dense<0.000000e+00> : vector<32x128xf32>
    %87 = tpu.matmul %83, %5, %cst_44 {dimension_numbers = #tpu.dot_dimension_numbers<[1], [0], [0], [1], [0, 0, 1, 1], [], []>} : vector<32x7xf32>, vector<7x128xf32>, vector<32x128xf32> -> vector<32x128xf32>
    %88 = arith.addf %86, %87 : vector<32x128xf32>
    %c2_45 = arith.constant 2 : index
    %c0_46 = arith.constant 0 : index
    %c0_47 = arith.constant 0 : index
    %89 = vector.load %arg2[%c2_45, %c0_46, %c0_47] : memref<4x32x4xi32, #tpu.memory_space<vmem>>, vector<1x32x4xi32>
    %90 = vector.shape_cast %89 : vector<1x32x4xi32> to vector<32x4xi32>
    %91 = vector.extract_strided_slice %90 {offsets = [0, 0], sizes = [32, 1], strides = [1, 1]} : vector<32x4xi32> to vector<32x1xi32>
    %92 = vector.broadcast %91 : vector<32x1xi32> to vector<32x76xi32>
    %93 = arith.cmpi eq, %92, %8 : vector<32x76xi32>
    %94 = vector.extract_strided_slice %90 {offsets = [0, 1], sizes = [32, 1], strides = [1, 1]} : vector<32x4xi32> to vector<32x1xi32>
    %95 = vector.broadcast %94 : vector<32x1xi32> to vector<32x76xi32>
    %96 = arith.cmpi eq, %95, %8 : vector<32x76xi32>
    %97 = arith.ori %93, %96 : vector<32x76xi1>
    %98 = vector.extract_strided_slice %90 {offsets = [0, 2], sizes = [32, 1], strides = [1, 1]} : vector<32x4xi32> to vector<32x1xi32>
    %99 = vector.broadcast %98 : vector<32x1xi32> to vector<32x76xi32>
    %100 = arith.cmpi eq, %99, %8 : vector<32x76xi32>
    %101 = arith.ori %97, %100 : vector<32x76xi1>
    %102 = vector.extract_strided_slice %90 {offsets = [0, 3], sizes = [32, 1], strides = [1, 1]} : vector<32x4xi32> to vector<32x1xi32>
    %103 = vector.broadcast %102 : vector<32x1xi32> to vector<32x76xi32>
    %104 = arith.cmpi eq, %103, %8 : vector<32x76xi32>
    %105 = arith.ori %101, %104 : vector<32x76xi1>
    %106 = arith.extui %105 : vector<32x76xi1> to vector<32x76xi32>
    %107 = arith.sitofp %106 : vector<32x76xi32> to vector<32x76xf32>
    %cst_48 = arith.constant dense<0.000000e+00> : vector<32x128xf32>
    %108 = tpu.matmul %107, %6, %cst_48 {dimension_numbers = #tpu.dot_dimension_numbers<[1], [0], [0], [1], [0, 0, 1, 1], [], []>} : vector<32x76xf32>, vector<76x128xf32>, vector<32x128xf32> -> vector<32x128xf32>
    %109 = arith.addf %88, %108 : vector<32x128xf32>
    %110 = arith.addf %109, %7 : vector<32x128xf32>
    %c2_49 = arith.constant 2 : index
    %c0_50 = arith.constant 0 : index
    %c0_51 = arith.constant 0 : index
    %111 = vector.load %arg6[%c2_49, %c0_50, %c0_51] : memref<4x32x128xf32, #tpu.memory_space<vmem>>, vector<1x32x128xf32>
    %112 = vector.shape_cast %111 : vector<1x32x128xf32> to vector<32x128xf32>
    %113 = vector.shape_cast %110 : vector<32x128xf32> to vector<1x32x128xf32>
    tpu.vector_store %arg6[%c2_49, %c0_50, %c0_51], %113 {strides = array<i32>} : memref<4x32x128xf32, #tpu.memory_space<vmem>>, vector<1x32x128xf32>,
    %c3 = arith.constant 3 : index
    %c0_52 = arith.constant 0 : index
    %c0_53 = arith.constant 0 : index
    %114 = vector.load %arg1[%c3, %c0_52, %c0_53] : memref<4x32x7xbf16, #tpu.memory_space<vmem>>, vector<1x32x7xbf16>
    %115 = vector.shape_cast %114 : vector<1x32x7xbf16> to vector<32x7xbf16>
    %116 = arith.extf %115 : vector<32x7xbf16> to vector<32x7xf32>
    %c1_i32_54 = arith.constant 1 : i32
    %117 = tpu.dynamic_rotate %116 by %c1_i32_54 dim 0 : vector<32x7xf32>, i32 -> vector<32x7xf32>
    %c31_i32_55 = arith.constant 31 : i32
    %118 = tpu.dynamic_rotate %116 by %c31_i32_55 dim 0 : vector<32x7xf32>, i32 -> vector<32x7xf32>
    %cst_56 = arith.constant dense<0.000000e+00> : vector<32x128xf32>
    %119 = tpu.matmul %117, %1, %cst_56 {dimension_numbers = #tpu.dot_dimension_numbers<[1], [0], [0], [1], [0, 0, 1, 1], [], []>} : vector<32x7xf32>, vector<7x128xf32>, vector<32x128xf32> -> vector<32x128xf32>
    %cst_57 = arith.constant dense<0.000000e+00> : vector<32x128xf32>
    %120 = tpu.matmul %116, %3, %cst_57 {dimension_numbers = #tpu.dot_dimension_numbers<[1], [0], [0], [1], [0, 0, 1, 1], [], []>} : vector<32x7xf32>, vector<7x128xf32>, vector<32x128xf32> -> vector<32x128xf32>
    %121 = arith.addf %119, %120 : vector<32x128xf32>
    %cst_58 = arith.constant dense<0.000000e+00> : vector<32x128xf32>
    %122 = tpu.matmul %118, %5, %cst_58 {dimension_numbers = #tpu.dot_dimension_numbers<[1], [0], [0], [1], [0, 0, 1, 1], [], []>} : vector<32x7xf32>, vector<7x128xf32>, vector<32x128xf32> -> vector<32x128xf32>
    %123 = arith.addf %121, %122 : vector<32x128xf32>
    %c3_59 = arith.constant 3 : index
    %c0_60 = arith.constant 0 : index
    %c0_61 = arith.constant 0 : index
    %124 = vector.load %arg2[%c3_59, %c0_60, %c0_61] : memref<4x32x4xi32, #tpu.memory_space<vmem>>, vector<1x32x4xi32>
    %125 = vector.shape_cast %124 : vector<1x32x4xi32> to vector<32x4xi32>
    %126 = vector.extract_strided_slice %125 {offsets = [0, 0], sizes = [32, 1], strides = [1, 1]} : vector<32x4xi32> to vector<32x1xi32>
    %127 = vector.broadcast %126 : vector<32x1xi32> to vector<32x76xi32>
    %128 = arith.cmpi eq, %127, %8 : vector<32x76xi32>
    %129 = vector.extract_strided_slice %125 {offsets = [0, 1], sizes = [32, 1], strides = [1, 1]} : vector<32x4xi32> to vector<32x1xi32>
    %130 = vector.broadcast %129 : vector<32x1xi32> to vector<32x76xi32>
    %131 = arith.cmpi eq, %130, %8 : vector<32x76xi32>
    %132 = arith.ori %128, %131 : vector<32x76xi1>
    %133 = vector.extract_strided_slice %125 {offsets = [0, 2], sizes = [32, 1], strides = [1, 1]} : vector<32x4xi32> to vector<32x1xi32>
    %134 = vector.broadcast %133 : vector<32x1xi32> to vector<32x76xi32>
    %135 = arith.cmpi eq, %134, %8 : vector<32x76xi32>
    %136 = arith.ori %132, %135 : vector<32x76xi1>
    %137 = vector.extract_strided_slice %125 {offsets = [0, 3], sizes = [32, 1], strides = [1, 1]} : vector<32x4xi32> to vector<32x1xi32>
    %138 = vector.broadcast %137 : vector<32x1xi32> to vector<32x76xi32>
    %139 = arith.cmpi eq, %138, %8 : vector<32x76xi32>
    %140 = arith.ori %136, %139 : vector<32x76xi1>
    %141 = arith.extui %140 : vector<32x76xi1> to vector<32x76xi32>
    %142 = arith.sitofp %141 : vector<32x76xi32> to vector<32x76xf32>
    %cst_62 = arith.constant dense<0.000000e+00> : vector<32x128xf32>
    %143 = tpu.matmul %142, %6, %cst_62 {dimension_numbers = #tpu.dot_dimension_numbers<[1], [0], [0], [1], [0, 0, 1, 1], [], []>} : vector<32x76xf32>, vector<76x128xf32>, vector<32x128xf32> -> vector<32x128xf32>
    %144 = arith.addf %123, %143 : vector<32x128xf32>
    %145 = arith.addf %144, %7 : vector<32x128xf32>
    %c3_63 = arith.constant 3 : index
    %c0_64 = arith.constant 0 : index
    %c0_65 = arith.constant 0 : index
    %146 = vector.load %arg6[%c3_63, %c0_64, %c0_65] : memref<4x32x128xf32, #tpu.memory_space<vmem>>, vector<1x32x128xf32>
    %147 = vector.shape_cast %146 : vector<1x32x128xf32> to vector<32x128xf32>
    %148 = vector.shape_cast %145 : vector<32x128xf32> to vector<1x32x128xf32>
    tpu.vector_store %arg6[%c3_63, %c0_64, %c0_65], %148 {strides = array<i32>} : memref<4x32x128xf32, #tpu.memory_space<vmem>>, vector<1x32x128xf32>,
    return
  }
  func.func @transform_0(%arg0: i32) -> (i32, i32, i32) {
    %c0_i32 = arith.constant 0 : i32
    %c0_i32_0 = arith.constant 0 : i32
    %c0_i32_1 = arith.constant 0 : i32
    return %arg0, %c0_i32, %c0_i32_0 : i32, i32, i32
  }
  func.func @transform_1(%arg0: i32) -> (i32, i32, i32) {
    %c0_i32 = arith.constant 0 : i32
    %c0_i32_0 = arith.constant 0 : i32
    %c0_i32_1 = arith.constant 0 : i32
    return %arg0, %c0_i32, %c0_i32_0 : i32, i32, i32
  }
  func.func @transform_2(%arg0: i32) -> (i32, i32) {
    %c0_i32 = arith.constant 0 : i32
    %c0_i32_0 = arith.constant 0 : i32
    %c0_i32_1 = arith.constant 0 : i32
    return %c0_i32, %c0_i32_0 : i32, i32
  }
  func.func @transform_3(%arg0: i32) -> (i32, i32, i32) {
    %c0_i32 = arith.constant 0 : i32
    %c0_i32_0 = arith.constant 0 : i32
    %c0_i32_1 = arith.constant 0 : i32
    %c0_i32_2 = arith.constant 0 : i32
    return %c0_i32, %c0_i32_0, %c0_i32_1 : i32, i32, i32
  }
  func.func @transform_4(%arg0: i32) -> (i32, i32) {
    %c0_i32 = arith.constant 0 : i32
    %c0_i32_0 = arith.constant 0 : i32
    %c0_i32_1 = arith.constant 0 : i32
    return %c0_i32, %c0_i32_0 : i32, i32
  }
  func.func @transform_5(%arg0: i32) -> (i32, i32, i32) {
    %c0_i32 = arith.constant 0 : i32
    %c0_i32_0 = arith.constant 0 : i32
    %c0_i32_1 = arith.constant 0 : i32
    return %arg0, %c0_i32, %c0_i32_0 : i32, i32, i32
  }
}

</mosaic_0001>

<llo_original>
// kernel: tpu_custom_call.1
$region0: #{tpu_custom_call.1}
  #allocation0 [shape = 'u32[]', space=smem, size = 0x4, offset = 0x4, fixed_abs, tag = 'smem constant byte address 0x4 - core index']
  #allocation1 [shape = 'u32[144,128]{1,0:T(1,128)}', space=vmem, size = 0x12000, scoped, tag = 'internal scratch']
  %s0 = inlined_call_operand.vmem [shape: bf16[8,32,7], index: 0, kind: input, shape index: {}]
  %s1 = inlined_call_operand.vmem [shape: s32[8,32,4], index: 1, kind: input, shape index: {}]
  %s2 = inlined_call_operand.vmem [shape: f32[32,128], index: 2, kind: input, shape index: {}]
  %s3 = inlined_call_operand.vmem [shape: f32[3,7,128], index: 3, kind: input, shape index: {}]
  %s4 = inlined_call_operand.vmem [shape: f32[76,128], index: 4, kind: input, shape index: {}]
  %s5 = inlined_call_operand.hbm [shape: f32[8,32,128], index: 5, kind: output, shape index: {}]
  %s6 = sld [smem:[#allocation0]]
  $region53: #{tpu_custom_call.1} parent=0
    _
  %s8 = ssub.s32 1, %s6
  %s9 = scalar_select 0, %s8, %s6
  $region1: #{tpu_custom_call.1} parent=0
    #allocation2 [shape = 'u8[131072]{0}', space=vmem, size = 0x20000, scoped, tag = 'output window, operand 0']
    #allocation3 [shape = 's32[2]{0}', space=sflag, size = 0x8, scoped, tag = 'scoped memory for tpu_custom_call.1']
    %10 = vsyncpa [#allocation3], 0
    %s11 = scalar_lea.sflag [#allocation3], 1
    %12 = vsyncpa %s11, 0
    loop: start=0, step=1, limit=4
    $region2: #{tpu_custom_call.1} parent=1 // loop_pre_header
      _
    $region3: #{tpu_custom_call.1} parent=1 // loop_header
      %s14 = sphi 0, %s18
      %p15 = scmp.ge.s32.totalorder %s14, 4
      %s24 = sphi 0, %s26
      %s27 = sphi 0, %s24
      %s28 = sphi 0, %s27
      %s44 = sphi 0, %s28
      %s50 = sphi 0, %s52
      %s53 = sphi 0, %s50
      %s54 = sphi 0, %s53
      %s70 = sphi 0, %s54
      %s74 = sphi 0, %s74
      %s76 = sphi 0, %s74
      %s77 = sphi 0, %s76
      %s91 = sphi 0, %s77
      %s95 = sphi 0, %s95
      %s97 = sphi 0, %s95
      %s98 = sphi 0, %s97
      %s112 = sphi 0, %s98
      %s116 = sphi 0, %s116
      %s118 = sphi 0, %s116
      %s119 = sphi 0, %s118
      %s133 = sphi 0, %s119
      %s139 = sphi 0, %s141
      %s142 = sphi 0, %s139
      %s143 = sphi 0, %s142
      %s159 = sphi 0, %s143
    $region4: #{tpu_custom_call.1} parent=1 // loop_header_branch
      %17 = sbr.rel (%p15) target = $region8
    $region5: #{tpu_custom_call.1} parent=1 // loop_body
      %s19 = ssub.s32 %s14, 1
      %s20 = ssub.s32 %s14, 2
      %s21 = sadd.s32 %s14, 1
      %s22 = ssub.s32 %s14, %s21
      %p23 = scmp.eq.s32.totalorder %s22, 0
      %s25 = sadd.s32 %s24, 1
      %s26 = scalar_select %p23, %s24, %s25
      %p29 = pneg %p23
      %p30 = scmp.eq.s32.totalorder %s14, 1
      %p31 = por %p29, %p30
      %p32 = scmp.ne.s32.totalorder %s24, %s27
      %p33 = scmp.eq.s32.totalorder %s14, 0
      %p34 = por %p32, %p33
      %p35 = scmp.ne.s32.totalorder %s24, %s27
      %p36 = scmp.eq.s32.totalorder %s19, 1
      %p37 = por %p35, %p36
      %p38 = scmp.ne.s32.totalorder %s27, %s28
      %p39 = scmp.eq.s32.totalorder %s19, 0
      %p40 = por %p38, %p39
      %p41 = scmp.ne.s32.totalorder %s27, %s28
      %p42 = scmp.eq.s32.totalorder %s20, 1
      %p43 = por %p41, %p42
      %p45 = scmp.ne.s32.totalorder %s28, %s44
      %p46 = scmp.eq.s32.totalorder %s20, 0
      %p47 = por %p45, %p46
      %s48 = ssub.s32 %s14, %s21
      %p49 = scmp.eq.s32.totalorder %s48, 0
      %s51 = sadd.s32 %s50, 1
      %s52 = scalar_select %p49, %s50, %s51
      %p55 = pneg %p49
      %p56 = scmp.eq.s32.totalorder %s14, 1
      %p57 = por %p55, %p56
      %p58 = scmp.ne.s32.totalorder %s50, %s53
      %p59 = scmp.eq.s32.totalorder %s14, 0
      %p60 = por %p58, %p59
      %p61 = scmp.ne.s32.totalorder %s50, %s53
      %p62 = scmp.eq.s32.totalorder %s19, 1
      %p63 = por %p61, %p62
      %p64 = scmp.ne.s32.totalorder %s53, %s54
      %p65 = scmp.eq.s32.totalorder %s19, 0
      %p66 = por %p64, %p65
      %p67 = scmp.ne.s32.totalorder %s53, %s54
      %p68 = scmp.eq.s32.totalorder %s20, 1
      %p69 = por %p67, %p68
      %p71 = scmp.ne.s32.totalorder %s54, %s70
      %p72 = scmp.eq.s32.totalorder %s20, 0
      %p73 = por %p71, %p72
      %s75 = sadd.s32 %s74, 1
      %p78 = scmp.eq.s32.totalorder %s14, 1
      %p79 = scmp.ne.s32.totalorder %s74, %s76
      %p80 = scmp.eq.s32.totalorder %s14, 0
      %p81 = por %p79, %p80
      %p82 = scmp.ne.s32.totalorder %s74, %s76
      %p83 = scmp.eq.s32.totalorder %s19, 1
      %p84 = por %p82, %p83
      %p85 = scmp.ne.s32.totalorder %s76, %s77
      %p86 = scmp.eq.s32.totalorder %s19, 0
      %p87 = por %p85, %p86
      %p88 = scmp.ne.s32.totalorder %s76, %s77
      %p89 = scmp.eq.s32.totalorder %s20, 1
      %p90 = por %p88, %p89
      %p92 = scmp.ne.s32.totalorder %s77, %s91
      %p93 = scmp.eq.s32.totalorder %s20, 0
      %p94 = por %p92, %p93
      %s96 = sadd.s32 %s95, 1
      %p99 = scmp.eq.s32.totalorder %s14, 1
      %p100 = scmp.ne.s32.totalorder %s95, %s97
      %p101 = scmp.eq.s32.totalorder %s14, 0
      %p102 = por %p100, %p101
      %p103 = scmp.ne.s32.totalorder %s95, %s97
      %p104 = scmp.eq.s32.totalorder %s19, 1
      %p105 = por %p103, %p104
      %p106 = scmp.ne.s32.totalorder %s97, %s98
      %p107 = scmp.eq.s32.totalorder %s19, 0
      %p108 = por %p106, %p107
      %p109 = scmp.ne.s32.totalorder %s97, %s98
      %p110 = scmp.eq.s32.totalorder %s20, 1
      %p111 = por %p109, %p110
      %p113 = scmp.ne.s32.totalorder %s98, %s112
      %p114 = scmp.eq.s32.totalorder %s20, 0
      %p115 = por %p113, %p114
      %s117 = sadd.s32 %s116, 1
      %p120 = scmp.eq.s32.totalorder %s14, 1
      %p121 = scmp.ne.s32.totalorder %s116, %s118
      %p122 = scmp.eq.s32.totalorder %s14, 0
      %p123 = por %p121, %p122
      %p124 = scmp.ne.s32.totalorder %s116, %s118
      %p125 = scmp.eq.s32.totalorder %s19, 1
      %p126 = por %p124, %p125
      %p127 = scmp.ne.s32.totalorder %s118, %s119
      %p128 = scmp.eq.s32.totalorder %s19, 0
      %p129 = por %p127, %p128
      %p130 = scmp.ne.s32.totalorder %s118, %s119
      %p131 = scmp.eq.s32.totalorder %s20, 1
      %p132 = por %p130, %p131
      %p134 = scmp.ne.s32.totalorder %s119, %s133
      %p135 = scmp.eq.s32.totalorder %s20, 0
      %p136 = por %p134, %p135
      %s137 = ssub.s32 %s14, %s21
      %p138 = scmp.eq.s32.totalorder %s137, 0
      %s140 = sadd.s32 %s139, 1
      %s141 = scalar_select %p138, %s139, %s140
      %p144 = pneg %p138
      %p145 = scmp.eq.s32.totalorder %s14, 1
      %p146 = por %p144, %p145
      %p147 = scmp.ne.s32.totalorder %s139, %s142
      %p148 = scmp.eq.s32.totalorder %s14, 0
      %p149 = por %p147, %p148
      %p150 = scmp.ne.s32.totalorder %s139, %s142
      %p151 = scmp.eq.s32.totalorder %s19, 1
      %p152 = por %p150, %p151
      %p153 = scmp.ne.s32.totalorder %s142, %s143
      %p154 = scmp.eq.s32.totalorder %s19, 0
      %p155 = por %p153, %p154
      %p156 = scmp.ne.s32.totalorder %s142, %s143
      %p157 = scmp.eq.s32.totalorder %s20, 1
      %p158 = por %p156, %p157
      %p160 = scmp.ne.s32.totalorder %s143, %s159
      %p161 = scmp.eq.s32.totalorder %s20, 0
      %p162 = por %p160, %p161
      %p163 = scmp.le.s32.totalorder 1, %s14
      %p164 = scmp.lt.s32.totalorder %s14, 3
      %p165 = pnand %p163, %p164
      %p166 = pneg %p165
      // Predicated region
      $region9: #{tpu_custom_call.1} parent=5 // pred_check
        _
      $region10: #{tpu_custom_call.1} parent=5 // pred_check_branch
        %168 = sbr.rel (%p165) target = $region12
      $region11: #{tpu_custom_call.1} parent=5 // pred_region
        %s169 = ssub.s32 %s14, 1
        // Predicated region
        $region13: #{tpu_custom_call.1} parent=11 // pred_check
          %p170 = pneg %p87
        $region14: #{tpu_custom_call.1} parent=11 // pred_check_branch
          %172 = sbr.rel (%p170) target = $region16
        $region15: #{tpu_custom_call.1} parent=11 // pred_region
          _
        $region16: #{tpu_custom_call.1} parent=11 // pred_fallthru
          _
        // Predicated region
        $region17: #{tpu_custom_call.1} parent=11 // pred_check
          %p173 = pneg %p108
        $region18: #{tpu_custom_call.1} parent=11 // pred_check_branch
          %175 = sbr.rel (%p173) target = $region20
        $region19: #{tpu_custom_call.1} parent=11 // pred_region
          _
        $region20: #{tpu_custom_call.1} parent=11 // pred_fallthru
          _
        // Predicated region
        $region21: #{tpu_custom_call.1} parent=11 // pred_check
          %p176 = pneg %p129
        $region22: #{tpu_custom_call.1} parent=11 // pred_check_branch
          %178 = sbr.rel (%p176) target = $region24
        $region23: #{tpu_custom_call.1} parent=11 // pred_region
          _
        $region24: #{tpu_custom_call.1} parent=11 // pred_fallthru
          _
      $region12: #{tpu_custom_call.1} parent=5 // pred_fallthru
        _
      %p179 = scmp.lt.s32.totalorder %s14, 2
      // Predicated region
      $region25: #{tpu_custom_call.1} parent=5 // pred_check
        %p180 = pneg %p179
      $region26: #{tpu_custom_call.1} parent=5 // pred_check_branch
        %182 = sbr.rel (%p180) target = $region28
      $region27: #{tpu_custom_call.1} parent=5 // pred_region
        // Predicated region
        $region29: #{tpu_custom_call.1} parent=27 // pred_check
          %p183 = pneg %p34
        $region30: #{tpu_custom_call.1} parent=27 // pred_check_branch
          %185 = sbr.rel (%p183) target = $region32
        $region31: #{tpu_custom_call.1} parent=27 // pred_region
          %s186 = smul.u32 4, %s14
          %p187 = scmp.lt.s32.totalorder %s186, 7
          %s188 = scalar_select %p187, %s186, 7
          %s189 = smul.addr %s188, 4
          %s190 = smul.addr %s189, 4
          %s191 = scalar_lea.vmem %s0, %s190
          %s192 = smul.u32 4, %s14
        $region32: #{tpu_custom_call.1} parent=27 // pred_fallthru
          _
        // Predicated region
        $region33: #{tpu_custom_call.1} parent=27 // pred_check
          %p193 = pneg %p60
        $region34: #{tpu_custom_call.1} parent=27 // pred_check_branch
          %195 = sbr.rel (%p193) target = $region36
        $region35: #{tpu_custom_call.1} parent=27 // pred_region
          %s196 = smul.u32 4, %s14
          %p197 = scmp.lt.s32.totalorder %s196, 7
          %s198 = scalar_select %p197, %s196, 7
          %s199 = smul.addr %s198, 4
          %s200 = smul.addr %s199, 8
          %s201 = scalar_lea.vmem %s1, %s200
          %s202 = smul.u32 4, %s14
        $region36: #{tpu_custom_call.1} parent=27 // pred_fallthru
          _
      $region28: #{tpu_custom_call.1} parent=5 // pred_fallthru
        _
      %p203 = scmp.le.s32.totalorder 1, %s14
      %p204 = scmp.lt.s32.totalorder %s14, 3
      %p205 = pnand %p203, %p204
      %p206 = pneg %p205
      // Predicated region
      $region37: #{tpu_custom_call.1} parent=5 // pred_check
        _
      $region38: #{tpu_custom_call.1} parent=5 // pred_check_branch
        %208 = sbr.rel (%p205) target = $region40
      $region39: #{tpu_custom_call.1} parent=5 // pred_region
        %s209 = ssub.s32 %s14, 1
        %s210 = smul.u32 4, %s19
        %p211 = scmp.lt.s32.totalorder %s210, 7
        %s212 = scalar_select %p211, %s210, 7
        %s213 = smul.addr %s212, 4
        %s214 = smul.addr %s213, 4
        %s215 = scalar_lea.vmem %s0, %s214
        %p216 = pneg %p40
        %p217 = pneg %p37
        %s218 = smul.u32 4, %s19
        %p219 = scmp.lt.s32.totalorder %s218, 7
        %s220 = scalar_select %p219, %s218, 7
        %s221 = smul.addr %s220, 4
        %s222 = smul.addr %s221, 8
        %s223 = scalar_lea.vmem %s1, %s222
        %p224 = pneg %p66
        %p225 = pneg %p63
        %p226 = pneg %p87
        %p227 = pneg %p84
        %p228 = pneg %p108
        %p229 = pneg %p105
        %p230 = pneg %p129
        %p231 = pneg %p126
        %p232 = pneg %p155
        %p233 = pneg %p152
        %s234 = sand.u32 %s142, 1
        %s235 = scalar_lea.sflag [#allocation3], %s234
        %s236 = sand.u32 %s142, 1
        %s237 = smul.addr %s236, 128
        %s238 = scalar_lea.vmem [#allocation2], %s237
        %s239 = smul.u32 4, %s19
        %p240 = scmp.lt.s32.totalorder %s239, 7
        %s241 = scalar_select %p240, %s239, 7
        %s242 = smul.addr %s241, 4
        %s243 = smul.addr %s242, 4
        %s244 = scalar_lea.vmem %s0, %s243
        %s245 = smul.u32 4, %s19
        %s246 = smul.u32 4, %s19
        %p247 = scmp.lt.s32.totalorder %s246, 7
        %s248 = scalar_select %p247, %s246, 7
        %s249 = smul.addr %s248, 4
        %s250 = smul.addr %s249, 8
        %s251 = scalar_lea.vmem %s1, %s250
        %s252 = smul.u32 4, %s19
        %s253 = smul.u32 4, %s19
        %v254 = vld [vmem:[%s3] sm:$0x7f]
        %s255 = scalar_lea.vmem %s3, 8
        %v256 = vld [vmem:[%s255] sm:$0x7f]
        %s257 = scalar_lea.vmem %s3, 16
        %v258 = vld [vmem:[%s257] sm:$0x7f]
        %v259 = vld [vmem:[%s4] sm:$0xff]
        %v260 = vld [vmem:[%s4 + $0x8] sm:$0xff]
        %v261 = vld [vmem:[%s4 + $0x10] sm:$0xff]
        %v262 = vld [vmem:[%s4 + $0x18] sm:$0xff]
        %v263 = vld [vmem:[%s4 + $0x20] sm:$0xff]
        %v264 = vld [vmem:[%s4 + $0x28] sm:$0xff]
        %v265 = vld [vmem:[%s4 + $0x30] sm:$0xff]
        %v266 = vld [vmem:[%s4 + $0x38] sm:$0xff]
        %v267 = vld [vmem:[%s4 + $0x40] sm:$0xff]
        %v268 = vld [vmem:[%s4 + $0x48] sm:$0xf]
        %v269 = vld [vmem:[%s2] sm:$0xff]
        %v270 = vld [vmem:[%s2 + $0x8] sm:$0xff]
        %v271 = vld [vmem:[%s2 + $0x10] sm:$0xff]
        %v272 = vld [vmem:[%s2 + $0x18] sm:$0xff]
        %v273 = vlaneseq
        %v274 = vand.u32 %v273, 127
        %v275 = vld [vmem:[%s244] sm:$0xf]
        %v276 = vld [vmem:[%s244 + $0x4] sm:$0xf]
        %v277 = vld [vmem:[%s244 + $0x8] sm:$0xf]
        %v278 = vld [vmem:[%s244 + $0xc] sm:$0xf]
        %v279 = vunpack.c.l.bf16 %v275
        %v280 = vunpack.c.l.bf16 %v276
        %v281 = vunpack.c.l.bf16 %v277
        %v282 = vunpack.c.l.bf16 %v278
        %v283 = vrot.slane %v279, 7
        %v284 = vrot.slane %v280, 7
        %v285 = vrot.slane %v281, 7
        %v286 = vrot.slane %v282, 7
        %v287 = vlaneseq
        %v288 = vshrl.u32 %v287, 7
        %vm289 = vcmp.lt.s32.totalorder %v288, 1
        %v290 = vsel %vm289, %v285, %v286
        %v291 = vsel %vm289, %v284, %v285
        %v292 = vsel %vm289, %v283, %v284
        %v293 = vsel %vm289, %v286, %v283
        %v294 = vrot.slane %v279, 1
        %v295 = vrot.slane %v280, 1
        %v296 = vrot.slane %v281, 1
        %v297 = vrot.slane %v282, 1
        %vm298 = vcmp.lt.s32.totalorder %v288, 7
        %v299 = vsel %vm298, %v296, %v297
        %v300 = vsel %vm298, %v295, %v296
        %v301 = vsel %vm298, %v294, %v295
        %v302 = vsel %vm298, %v297, %v294
        %vm303 = vcmask 56320
        %v305 = vsel %vm303, %v279, 0
        %v308 = vsel %vm303, %v280, 0
        %v311 = vsel %vm303, %v281, 0
        %v314 = vsel %vm303, %v282, 0
        %vm316 = vcmask 1046528
        %v318 = vsel %vm316, %v256, 0
        %320 = vmatprep.subr.mxu0 0.0
        %321 = vmatpush1.msra.mxu0 %v318
        %322 = vmatprep.subr.mxu0 0.0
        %323 = vmatpush1.msra.mxu0 0.0
        %324 = vmatprep.subr.mxu0 0.0
        %325 = vmatpush1.msra.mxu0 0.0
        %326 = vmatprep.subr.mxu0 0.0
        %327 = vmatpush1.msra.mxu0 0.0
        %328 = vmatprep.subr.mxu0 0.0
        %329 = vmatpush1.msra.mxu0 0.0
        %330 = vmatprep.subr.mxu0 0.0
        %331 = vmatpush1.msra.mxu0 0.0
        %332 = vmatprep.subr.mxu0 0.0
        %333 = vmatpush1.msra.mxu0 0.0
        %334 = vmatprep.subr.mxu0 0.0
        %335 = vmatpush1.msra.mxu0 0.0
        %336 = vmatprep.subr.mxu0 0.0
        %337 = vmatpush1.msra.mxu0 0.0
        %338 = vmatprep.subr.mxu0 0.0
        %339 = vmatpush1.msra.mxu0 0.0
        %340 = vmatprep.subr.mxu0 0.0
        %341 = vmatpush1.msra.mxu0 0.0
        %342 = vmatprep.subr.mxu0 0.0
        %343 = vmatpush1.msra.mxu0 0.0
        %344 = vmatprep.subr.mxu0 0.0
        %345 = vmatpush1.msra.mxu0 0.0
        %346 = vmatprep.subr.mxu0 0.0
        %347 = vmatpush1.msra.mxu0 0.0
        %348 = vmatprep.subr.mxu0 0.0
        %349 = vmatpush1.msra.mxu0 0.0
        %350 = vmatprep.subr.mxu0 0.0
        %351 = vmatpush1.msra.mxu0 0.0
        %352 = vmatprep.subr.mxu0 0.0
        %353 = vmatpush1.msra.mxu0 0.0
        %354 = vmatprep.subr.mxu0 0.0
        %355 = vmatpush1.msra.mxu0 0.0
        %356 = vmatprep.subr.mxu0 0.0
        %357 = vmatpush1.msra.mxu0 0.0
        %358 = vmatprep.subr.mxu0 0.0
        %359 = vmatpush1.msra.mxu0 0.0
        %360 = vmatprep.subr.mxu0 0.0
        %361 = vmatpush1.msra.mxu0 0.0
        %362 = vmatprep.subr.mxu0 0.0
        %363 = vmatpush1.msra.mxu0 0.0
        %364 = vmatprep.subr.mxu0 0.0
        %365 = vmatpush1.msra.mxu0 0.0
        %366 = vmatprep.subr.mxu0 0.0
        %367 = vmatpush1.msra.mxu0 0.0
        %368 = vmatprep.subr.mxu0 0.0
        %369 = vmatpush1.msra.mxu0 0.0
        %370 = vmatprep.subr.mxu0 0.0
        %371 = vmatpush1.msra.mxu0 0.0
        %372 = vmatprep.subr.mxu0 0.0
        %373 = vmatpush1.msra.mxu0 0.0
        %374 = vmatprep.subr.mxu0 0.0
        %375 = vmatpush1.msra.mxu0 0.0
        %376 = vmatprep.subr.mxu0 0.0
        %377 = vmatpush1.msra.mxu0 0.0
        %378 = vmatprep.subr.mxu0 0.0
        %379 = vmatpush1.msra.mxu0 0.0
        %380 = vmatprep.subr.mxu0 0.0
        %381 = vmatpush1.msra.mxu0 0.0
        %382 = vmatprep.subr.mxu0 0.0
        %383 = vmatpush1.msra.mxu0 0.0
        %384 = vmatprep.mubr.f32.mxu0 0.0
        %385 = vmatmul.mubr.f32.gmra.mrb[0].mxu0 %v305
        %v386 = vpop.f32.mrb[0].mxu0
        %v387 = vadd.f32 0.0, %v386
        %v388 = vpop.f32.mrb[0].mxu0
        %389 = vmatprep.mubr.f32.mxu0 0.0
        %390 = vmatmul.mubr.f32.gmra.mrb[0].mxu0 %v308
        %v391 = vpop.f32.mrb[0].mxu0
        %v392 = vadd.f32 0.0, %v391
        %v393 = vpop.f32.mrb[0].mxu0
        %394 = vmatprep.mubr.f32.mxu0 0.0
        %395 = vmatmul.mubr.f32.gmra.mrb[0].mxu0 %v311
        %v396 = vpop.f32.mrb[0].mxu0
        %v397 = vadd.f32 0.0, %v396
        %v398 = vpop.f32.mrb[0].mxu0
        %399 = vmatprep.mubr.f32.mxu0 0.0
        %400 = vmatmul.mubr.f32.gmra.mrb[0].mxu0 %v314
        %v401 = vpop.f32.mrb[0].mxu0
        %v402 = vadd.f32 0.0, %v401
        %v403 = vpop.f32.mrb[0].mxu0
        %404 = vdwg.mxu0
        %v406 = vsel %vm303, %v293, 0
        %v409 = vsel %vm303, %v292, 0
        %v412 = vsel %vm303, %v291, 0
        %v415 = vsel %vm303, %v290, 0
        %v418 = vsel %vm316, %v254, 0
        %420 = vmatprep.subr.mxu0 0.0
        %421 = vmatpush1.msra.mxu0 %v418
        %422 = vmatprep.subr.mxu0 0.0
        %423 = vmatpush1.msra.mxu0 0.0
        %424 = vmatprep.subr.mxu0 0.0
        %425 = vmatpush1.msra.mxu0 0.0
        %426 = vmatprep.subr.mxu0 0.0
        %427 = vmatpush1.msra.mxu0 0.0
        %428 = vmatprep.subr.mxu0 0.0
        %429 = vmatpush1.msra.mxu0 0.0
        %430 = vmatprep.subr.mxu0 0.0
        %431 = vmatpush1.msra.mxu0 0.0
        %432 = vmatprep.subr.mxu0 0.0
        %433 = vmatpush1.msra.mxu0 0.0
        %434 = vmatprep.subr.mxu0 0.0
        %435 = vmatpush1.msra.mxu0 0.0
        %436 = vmatprep.subr.mxu0 0.0
        %437 = vmatpush1.msra.mxu0 0.0
        %438 = vmatprep.subr.mxu0 0.0
        %439 = vmatpush1.msra.mxu0 0.0
        %440 = vmatprep.subr.mxu0 0.0
        %441 = vmatpush1.msra.mxu0 0.0
        %442 = vmatprep.subr.mxu0 0.0
        %443 = vmatpush1.msra.mxu0 0.0
        %444 = vmatprep.subr.mxu0 0.0
        %445 = vmatpush1.msra.mxu0 0.0
        %446 = vmatprep.subr.mxu0 0.0
        %447 = vmatpush1.msra.mxu0 0.0
        %448 = vmatprep.subr.mxu0 0.0
        %449 = vmatpush1.msra.mxu0 0.0
        %450 = vmatprep.subr.mxu0 0.0
        %451 = vmatpush1.msra.mxu0 0.0
        %452 = vmatprep.subr.mxu0 0.0
        %453 = vmatpush1.msra.mxu0 0.0
        %454 = vmatprep.subr.mxu0 0.0
        %455 = vmatpush1.msra.mxu0 0.0
        %456 = vmatprep.subr.mxu0 0.0
        %457 = vmatpush1.msra.mxu0 0.0
        %458 = vmatprep.subr.mxu0 0.0
        %459 = vmatpush1.msra.mxu0 0.0
        %460 = vmatprep.subr.mxu0 0.0
        %461 = vmatpush1.msra.mxu0 0.0
        %462 = vmatprep.subr.mxu0 0.0
        %463 = vmatpush1.msra.mxu0 0.0
        %464 = vmatprep.subr.mxu0 0.0
        %465 = vmatpush1.msra.mxu0 0.0
        %466 = vmatprep.subr.mxu0 0.0
        %467 = vmatpush1.msra.mxu0 0.0
        %468 = vmatprep.subr.mxu0 0.0
        %469 = vmatpush1.msra.mxu0 0.0
        %470 = vmatprep.subr.mxu0 0.0
        %471 = vmatpush1.msra.mxu0 0.0
        %472 = vmatprep.subr.mxu0 0.0
        %473 = vmatpush1.msra.mxu0 0.0
        %474 = vmatprep.subr.mxu0 0.0
        %475 = vmatpush1.msra.mxu0 0.0
        %476 = vmatprep.subr.mxu0 0.0
        %477 = vmatpush1.msra.mxu0 0.0
        %478 = vmatprep.subr.mxu0 0.0
        %479 = vmatpush1.msra.mxu0 0.0
        %480 = vmatprep.subr.mxu0 0.0
        %481 = vmatpush1.msra.mxu0 0.0
        %482 = vmatprep.subr.mxu0 0.0
        %483 = vmatpush1.msra.mxu0 0.0
        %484 = vmatprep.mubr.f32.mxu0 0.0
        %485 = vmatmul.mubr.f32.gmra.mrb[0].mxu0 %v406
        %v486 = vpop.f32.mrb[0].mxu0
        %v487 = vadd.f32 %v387, %v486
        %v488 = vpop.f32.mrb[0].mxu0
        %489 = vmatprep.mubr.f32.mxu0 0.0
        %490 = vmatmul.mubr.f32.gmra.mrb[0].mxu0 %v409
        %v491 = vpop.f32.mrb[0].mxu0
        %v492 = vadd.f32 %v392, %v491
        %v493 = vpop.f32.mrb[0].mxu0
        %494 = vmatprep.mubr.f32.mxu0 0.0
        %495 = vmatmul.mubr.f32.gmra.mrb[0].mxu0 %v412
        %v496 = vpop.f32.mrb[0].mxu0
        %v497 = vadd.f32 %v397, %v496
        %v498 = vpop.f32.mrb[0].mxu0
        %499 = vmatprep.mubr.f32.mxu0 0.0
        %500 = vmatmul.mubr.f32.gmra.mrb[0].mxu0 %v415
        %v501 = vpop.f32.mrb[0].mxu0
        %v502 = vadd.f32 %v402, %v501
        %v503 = vpop.f32.mrb[0].mxu0
        %504 = vdwg.mxu0
        %v506 = vsel %vm303, %v301, 0
        %v509 = vsel %vm303, %v300, 0
        %v512 = vsel %vm303, %v299, 0
        %v515 = vsel %vm303, %v302, 0
        %v518 = vsel %vm316, %v258, 0
        %520 = vmatprep.subr.mxu0 0.0
        %521 = vmatpush1.msra.mxu0 %v518
        %522 = vmatprep.subr.mxu0 0.0
        %523 = vmatpush1.msra.mxu0 0.0
        %524 = vmatprep.subr.mxu0 0.0
        %525 = vmatpush1.msra.mxu0 0.0
        %526 = vmatprep.subr.mxu0 0.0
        %527 = vmatpush1.msra.mxu0 0.0
        %528 = vmatprep.subr.mxu0 0.0
        %529 = vmatpush1.msra.mxu0 0.0
        %530 = vmatprep.subr.mxu0 0.0
        %531 = vmatpush1.msra.mxu0 0.0
        %532 = vmatprep.subr.mxu0 0.0
        %533 = vmatpush1.msra.mxu0 0.0
        %534 = vmatprep.subr.mxu0 0.0
        %535 = vmatpush1.msra.mxu0 0.0
        %536 = vmatprep.subr.mxu0 0.0
        %537 = vmatpush1.msra.mxu0 0.0
        %538 = vmatprep.subr.mxu0 0.0
        %539 = vmatpush1.msra.mxu0 0.0
        %540 = vmatprep.subr.mxu0 0.0
        %541 = vmatpush1.msra.mxu0 0.0
        %542 = vmatprep.subr.mxu0 0.0
        %543 = vmatpush1.msra.mxu0 0.0
        %544 = vmatprep.subr.mxu0 0.0
        %545 = vmatpush1.msra.mxu0 0.0
        %546 = vmatprep.subr.mxu0 0.0
        %547 = vmatpush1.msra.mxu0 0.0
        %548 = vmatprep.subr.mxu0 0.0
        %549 = vmatpush1.msra.mxu0 0.0
        %550 = vmatprep.subr.mxu0 0.0
        %551 = vmatpush1.msra.mxu0 0.0
        %552 = vmatprep.subr.mxu0 0.0
        %553 = vmatpush1.msra.mxu0 0.0
        %554 = vmatprep.subr.mxu0 0.0
        %555 = vmatpush1.msra.mxu0 0.0
        %556 = vmatprep.subr.mxu0 0.0
        %557 = vmatpush1.msra.mxu0 0.0
        %558 = vmatprep.subr.mxu0 0.0
        %559 = vmatpush1.msra.mxu0 0.0
        %560 = vmatprep.subr.mxu0 0.0
        %561 = vmatpush1.msra.mxu0 0.0
        %562 = vmatprep.subr.mxu0 0.0
        %563 = vmatpush1.msra.mxu0 0.0
        %564 = vmatprep.subr.mxu0 0.0
        %565 = vmatpush1.msra.mxu0 0.0
        %566 = vmatprep.subr.mxu0 0.0
        %567 = vmatpush1.msra.mxu0 0.0
        %568 = vmatprep.subr.mxu0 0.0
        %569 = vmatpush1.msra.mxu0 0.0
        %570 = vmatprep.subr.mxu0 0.0
        %571 = vmatpush1.msra.mxu0 0.0
        %572 = vmatprep.subr.mxu0 0.0
        %573 = vmatpush1.msra.mxu0 0.0
        %574 = vmatprep.subr.mxu0 0.0
        %575 = vmatpush1.msra.mxu0 0.0
        %576 = vmatprep.subr.mxu0 0.0
        %577 = vmatpush1.msra.mxu0 0.0
        %578 = vmatprep.subr.mxu0 0.0
        %579 = vmatpush1.msra.mxu0 0.0
        %580 = vmatprep.subr.mxu0 0.0
        %581 = vmatpush1.msra.mxu0 0.0
        %582 = vmatprep.subr.mxu0 0.0
        %583 = vmatpush1.msra.mxu0 0.0
        %584 = vmatprep.mubr.f32.mxu0 0.0
        %585 = vmatmul.mubr.f32.gmra.mrb[0].mxu0 %v506
        %v586 = vpop.f32.mrb[0].mxu0
        %v587 = vadd.f32 0.0, %v586
        %v588 = vpop.f32.mrb[0].mxu0
        %589 = vmatprep.mubr.f32.mxu0 0.0
        %590 = vmatmul.mubr.f32.gmra.mrb[0].mxu0 %v509
        %v591 = vpop.f32.mrb[0].mxu0
        %v592 = vadd.f32 0.0, %v591
        %v593 = vpop.f32.mrb[0].mxu0
        %594 = vmatprep.mubr.f32.mxu0 0.0
        %595 = vmatmul.mubr.f32.gmra.mrb[0].mxu0 %v512
        %v596 = vpop.f32.mrb[0].mxu0
        %v597 = vadd.f32 0.0, %v596
        %v598 = vpop.f32.mrb[0].mxu0
        %599 = vmatprep.mubr.f32.mxu0 0.0
        %600 = vmatmul.mubr.f32.gmra.mrb[0].mxu0 %v515
        %v601 = vpop.f32.mrb[0].mxu0
        %v602 = vadd.f32 0.0, %v601
        %v603 = vpop.f32.mrb[0].mxu0
        %604 = vdwg.mxu0
        %v605 = vadd.f32 %v487, %v587
        %v606 = vadd.f32 %v492, %v592
        %v607 = vadd.f32 %v497, %v597
        %v608 = vadd.f32 %v502, %v602
        %v609 = vld [vmem:[%s251] sm:$0xff]
        %v610 = vld [vmem:[%s251 + $0x8] sm:$0xff]
        %v611 = vld [vmem:[%s251 + $0x10] sm:$0xff]
        %v612 = vld [vmem:[%s251 + $0x18] sm:$0xff]
        %613 = vset.pattern.permute.xlu0 0
        %614 = vperm.xlu0 %613, %v609
        %v615 = vpop.permute.xlu0 %614
        %616 = vset.pattern.permute.xlu0 0
        %617 = vperm.xlu0 %616, %v610
        %v618 = vpop.permute.xlu0 %617
        %619 = vset.pattern.permute.xlu0 0
        %620 = vperm.xlu0 %619, %v611
        %v621 = vpop.permute.xlu0 %620
        %622 = vset.pattern.permute.xlu0 0
        %623 = vperm.xlu0 %622, %v612
        %v624 = vpop.permute.xlu0 %623
        %vm625 = vcmp.eq.s32.totalorder %v615, %v274
        %vm626 = vcmp.eq.s32.totalorder %v618, %v274
        %vm627 = vcmp.eq.s32.totalorder %v621, %v274
        %vm628 = vcmp.eq.s32.totalorder %v624, %v274
        %629 = vset.pattern.permute.xlu0 1
        %630 = vperm.xlu0 %629, %v609
        %v631 = vpop.permute.xlu0 %630
        %632 = vset.pattern.permute.xlu0 1
        %633 = vperm.xlu0 %632, %v610
        %v634 = vpop.permute.xlu0 %633
        %635 = vset.pattern.permute.xlu0 1
        %636 = vperm.xlu0 %635, %v611
        %v637 = vpop.permute.xlu0 %636
        %638 = vset.pattern.permute.xlu0 1
        %639 = vperm.xlu0 %638, %v612
        %v640 = vpop.permute.xlu0 %639
        %vm641 = vcmp.eq.s32.totalorder %v631, %v274
        %vm642 = vcmp.eq.s32.totalorder %v634, %v274
        %vm643 = vcmp.eq.s32.totalorder %v637, %v274
        %vm644 = vcmp.eq.s32.totalorder %v640, %v274
        %vm645 = vmor %vm625, %vm641
        %vm646 = vmor %vm626, %vm642
        %vm647 = vmor %vm627, %vm643
        %vm648 = vmor %vm628, %vm644
        %649 = vset.pattern.permute.xlu0 2
        %650 = vperm.xlu0 %649, %v609
        %v651 = vpop.permute.xlu0 %650
        %652 = vset.pattern.permute.xlu0 2
        %653 = vperm.xlu0 %652, %v610
        %v654 = vpop.permute.xlu0 %653
        %655 = vset.pattern.permute.xlu0 2
        %656 = vperm.xlu0 %655, %v611
        %v657 = vpop.permute.xlu0 %656
        %658 = vset.pattern.permute.xlu0 2
        %659 = vperm.xlu0 %658, %v612
        %v660 = vpop.permute.xlu0 %659
        %vm661 = vcmp.eq.s32.totalorder %v651, %v274
        %vm662 = vcmp.eq.s32.totalorder %v654, %v274
        %vm663 = vcmp.eq.s32.totalorder %v657, %v274
        %vm664 = vcmp.eq.s32.totalorder %v660, %v274
        %vm665 = vmor %vm645, %vm661
        %vm666 = vmor %vm646, %vm662
        %vm667 = vmor %vm647, %vm663
        %vm668 = vmor %vm648, %vm664
        %669 = vset.pattern.permute.xlu0 3
        %670 = vperm.xlu0 %669, %v609
        %v671 = vpop.permute.xlu0 %670
        %672 = vset.pattern.permute.xlu0 3
        %673 = vperm.xlu0 %672, %v610
        %v674 = vpop.permute.xlu0 %673
        %675 = vset.pattern.permute.xlu0 3
        %676 = vperm.xlu0 %675, %v611
        %v677 = vpop.permute.xlu0 %676
        %678 = vset.pattern.permute.xlu0 3
        %679 = vperm.xlu0 %678, %v612
        %v680 = vpop.permute.xlu0 %679
        %vm681 = vcmp.eq.s32.totalorder %v671, %v274
        %vm682 = vcmp.eq.s32.totalorder %v674, %v274
        %vm683 = vcmp.eq.s32.totalorder %v677, %v274
        %vm684 = vcmp.eq.s32.totalorder %v680, %v274
        %vm685 = vmor %vm665, %vm681
        %vm686 = vmor %vm666, %vm682
        %vm687 = vmor %vm667, %vm683
        %vm688 = vmor %vm668, %vm684
        %v689 = vsel %vm685, 1, 0
        %v690 = vsel %vm686, 1, 0
        %v691 = vsel %vm687, 1, 0
        %v692 = vsel %vm688, 1, 0
        %v693 = vcvt.s32.f32 %v689
        %v694 = vcvt.s32.f32 %v690
        %v695 = vcvt.s32.f32 %v691
        %v696 = vcvt.s32.f32 %v692
        %vm697 = vcmask 621568
        %v699 = vsel %vm697, %v693, 0
        %v702 = vsel %vm697, %v694, 0
        %v705 = vsel %vm697, %v695, 0
        %v708 = vsel %vm697, %v696, 0
        %vm710 = vcmask 1043456
        %v712 = vsel %vm710, %v268, 0
        %714 = vmatprep.subr.mxu0 0.0
        %715 = vmatpush1.msra.mxu0 %v259
        %716 = vmatprep.subr.mxu0 0.0
        %717 = vmatpush1.msra.mxu0 %v260
        %718 = vmatprep.subr.mxu0 0.0
        %719 = vmatpush1.msra.mxu0 %v261
        %720 = vmatprep.subr.mxu0 0.0
        %721 = vmatpush1.msra.mxu0 %v262
        %722 = vmatprep.subr.mxu0 0.0
        %723 = vmatpush1.msra.mxu0 %v263
        %724 = vmatprep.subr.mxu0 0.0
        %725 = vmatpush1.msra.mxu0 %v264
        %726 = vmatprep.subr.mxu0 0.0
        %727 = vmatpush1.msra.mxu0 %v265
        %728 = vmatprep.subr.mxu0 0.0
        %729 = vmatpush1.msra.mxu0 %v266
        %730 = vmatprep.subr.mxu0 0.0
        %731 = vmatpush1.msra.mxu0 %v267
        %732 = vmatprep.subr.mxu0 0.0
        %733 = vmatpush1.msra.mxu0 %v712
        %734 = vmatprep.subr.mxu0 0.0
        %735 = vmatpush1.msra.mxu0 0.0
        %736 = vmatprep.subr.mxu0 0.0
        %737 = vmatpush1.msra.mxu0 0.0
        %738 = vmatprep.subr.mxu0 0.0
        %739 = vmatpush1.msra.mxu0 0.0
        %740 = vmatprep.subr.mxu0 0.0
        %741 = vmatpush1.msra.mxu0 0.0
        %742 = vmatprep.subr.mxu0 0.0
        %743 = vmatpush1.msra.mxu0 0.0
        %744 = vmatprep.subr.mxu0 0.0
        %745 = vmatpush1.msra.mxu0 0.0
        %746 = vmatprep.subr.mxu0 0.0
        %747 = vmatpush1.msra.mxu0 0.0
        %748 = vmatprep.subr.mxu0 0.0
        %749 = vmatpush1.msra.mxu0 0.0
        %750 = vmatprep.subr.mxu0 0.0
        %751 = vmatpush1.msra.mxu0 0.0
        %752 = vmatprep.subr.mxu0 0.0
        %753 = vmatpush1.msra.mxu0 0.0
        %754 = vmatprep.subr.mxu0 0.0
        %755 = vmatpush1.msra.mxu0 0.0
        %756 = vmatprep.subr.mxu0 0.0
        %757 = vmatpush1.msra.mxu0 0.0
        %758 = vmatprep.subr.mxu0 0.0
        %759 = vmatpush1.msra.mxu0 0.0
        %760 = vmatprep.subr.mxu0 0.0
        %761 = vmatpush1.msra.mxu0 0.0
        %762 = vmatprep.subr.mxu0 0.0
        %763 = vmatpush1.msra.mxu0 0.0
        %764 = vmatprep.subr.mxu0 0.0
        %765 = vmatpush1.msra.mxu0 0.0
        %766 = vmatprep.subr.mxu0 0.0
        %767 = vmatpush1.msra.mxu0 0.0
        %768 = vmatprep.subr.mxu0 0.0
        %769 = vmatpush1.msra.mxu0 0.0
        %770 = vmatprep.subr.mxu0 0.0
        %771 = vmatpush1.msra.mxu0 0.0
        %772 = vmatprep.subr.mxu0 0.0
        %773 = vmatpush1.msra.mxu0 0.0
        %774 = vmatprep.subr.mxu0 0.0
        %775 = vmatpush1.msra.mxu0 0.0
        %776 = vmatprep.subr.mxu0 0.0
        %777 = vmatpush1.msra.mxu0 0.0
        %778 = vmatprep.mubr.f32.mxu0 0.0
        %779 = vmatmul.mubr.f32.gmra.mrb[0].mxu0 %v699
        %v780 = vpop.f32.mrb[0].mxu0
        %v781 = vadd.f32 0.0, %v780
        %v782 = vpop.f32.mrb[0].mxu0
        %783 = vmatprep.mubr.f32.mxu0 0.0
        %784 = vmatmul.mubr.f32.gmra.mrb[0].mxu0 %v702
        %v785 = vpop.f32.mrb[0].mxu0
        %v786 = vadd.f32 0.0, %v785
        %v787 = vpop.f32.mrb[0].mxu0
        %788 = vmatprep.mubr.f32.mxu0 0.0
        %789 = vmatmul.mubr.f32.gmra.mrb[0].mxu0 %v705
        %v790 = vpop.f32.mrb[0].mxu0
        %v791 = vadd.f32 0.0, %v790
        %v792 = vpop.f32.mrb[0].mxu0
        %793 = vmatprep.mubr.f32.mxu0 0.0
        %794 = vmatmul.mubr.f32.gmra.mrb[0].mxu0 %v708
        %v795 = vpop.f32.mrb[0].mxu0
        %v796 = vadd.f32 0.0, %v795
        %v797 = vpop.f32.mrb[0].mxu0
        %798 = vdwg.mxu0
        %v799 = vadd.f32 %v605, %v781
        %v800 = vadd.f32 %v606, %v786
        %v801 = vadd.f32 %v607, %v791
        %v802 = vadd.f32 %v608, %v796
        %v803 = vadd.f32 %v799, %v269
        %v804 = vadd.f32 %v800, %v270
        %v805 = vadd.f32 %v801, %v271
        %v806 = vadd.f32 %v802, %v272
        %807 = vst [vmem:[%s238] sm:$0xff] %v803
        %808 = vst [vmem:[%s238 + $0x8] sm:$0xff] %v804
        %809 = vst [vmem:[%s238 + $0x10] sm:$0xff] %v805
        %810 = vst [vmem:[%s238 + $0x18] sm:$0xff] %v806
        %s811 = scalar_lea.vmem %s244, 16
        %v812 = vld [vmem:[%s811] sm:$0xf]
        %v813 = vld [vmem:[%s811 + $0x4] sm:$0xf]
        %v814 = vld [vmem:[%s811 + $0x8] sm:$0xf]
        %v815 = vld [vmem:[%s811 + $0xc] sm:$0xf]
        %v816 = vunpack.c.l.bf16 %v812
        %v817 = vunpack.c.l.bf16 %v813
        %v818 = vunpack.c.l.bf16 %v814
        %v819 = vunpack.c.l.bf16 %v815
        %v820 = vrot.slane %v816, 7
        %v821 = vrot.slane %v817, 7
        %v822 = vrot.slane %v818, 7
        %v823 = vrot.slane %v819, 7
        %v824 = vsel %vm289, %v822, %v823
        %v825 = vsel %vm289, %v821, %v822
        %v826 = vsel %vm289, %v820, %v821
        %v827 = vsel %vm289, %v823, %v820
        %v828 = vrot.slane %v816, 1
        %v829 = vrot.slane %v817, 1
        %v830 = vrot.slane %v818, 1
        %v831 = vrot.slane %v819, 1
        %v832 = vsel %vm298, %v830, %v831
        %v833 = vsel %vm298, %v829, %v830
        %v834 = vsel %vm298, %v828, %v829
        %v835 = vsel %vm298, %v831, %v828
        %v837 = vsel %vm303, %v816, 0
        %v840 = vsel %vm303, %v817, 0
        %v843 = vsel %vm303, %v818, 0
        %v846 = vsel %vm303, %v819, 0
        %848 = vmatprep.subr.mxu0 0.0
        %849 = vmatpush1.msra.mxu0 %v318
        %850 = vmatprep.subr.mxu0 0.0
        %851 = vmatpush1.msra.mxu0 0.0
        %852 = vmatprep.subr.mxu0 0.0
        %853 = vmatpush1.msra.mxu0 0.0
        %854 = vmatprep.subr.mxu0 0.0
        %855 = vmatpush1.msra.mxu0 0.0
        %856 = vmatprep.subr.mxu0 0.0
        %857 = vmatpush1.msra.mxu0 0.0
        %858 = vmatprep.subr.mxu0 0.0
        %859 = vmatpush1.msra.mxu0 0.0
        %860 = vmatprep.subr.mxu0 0.0
        %861 = vmatpush1.msra.mxu0 0.0
        %862 = vmatprep.subr.mxu0 0.0
        %863 = vmatpush1.msra.mxu0 0.0
        %864 = vmatprep.subr.mxu0 0.0
        %865 = vmatpush1.msra.mxu0 0.0
        %866 = vmatprep.subr.mxu0 0.0
        %867 = vmatpush1.msra.mxu0 0.0
        %868 = vmatprep.subr.mxu0 0.0
        %869 = vmatpush1.msra.mxu0 0.0
        %870 = vmatprep.subr.mxu0 0.0
        %871 = vmatpush1.msra.mxu0 0.0
        %872 = vmatprep.subr.mxu0 0.0
        %873 = vmatpush1.msra.mxu0 0.0
        %874 = vmatprep.subr.mxu0 0.0
        %875 = vmatpush1.msra.mxu0 0.0
        %876 = vmatprep.subr.mxu0 0.0
        %877 = vmatpush1.msra.mxu0 0.0
        %878 = vmatprep.subr.mxu0 0.0
        %879 = vmatpush1.msra.mxu0 0.0
        %880 = vmatprep.subr.mxu0 0.0
        %881 = vmatpush1.msra.mxu0 0.0
        %882 = vmatprep.subr.mxu0 0.0
        %883 = vmatpush1.msra.mxu0 0.0
        %884 = vmatprep.subr.mxu0 0.0
        %885 = vmatpush1.msra.mxu0 0.0
        %886 = vmatprep.subr.mxu0 0.0
        %887 = vmatpush1.msra.mxu0 0.0
        %888 = vmatprep.subr.mxu0 0.0
        %889 = vmatpush1.msra.mxu0 0.0
        %890 = vmatprep.subr.mxu0 0.0
        %891 = vmatpush1.msra.mxu0 0.0
        %892 = vmatprep.subr.mxu0 0.0
        %893 = vmatpush1.msra.mxu0 0.0
        %894 = vmatprep.subr.mxu0 0.0
        %895 = vmatpush1.msra.mxu0 0.0
        %896 = vmatprep.subr.mxu0 0.0
        %897 = vmatpush1.msra.mxu0 0.0
        %898 = vmatprep.subr.mxu0 0.0
        %899 = vmatpush1.msra.mxu0 0.0
        %900 = vmatprep.subr.mxu0 0.0
        %901 = vmatpush1.msra.mxu0 0.0
        %902 = vmatprep.subr.mxu0 0.0
        %903 = vmatpush1.msra.mxu0 0.0
        %904 = vmatprep.subr.mxu0 0.0
        %905 = vmatpush1.msra.mxu0 0.0
        %906 = vmatprep.subr.mxu0 0.0
        %907 = vmatpush1.msra.mxu0 0.0
        %908 = vmatprep.subr.mxu0 0.0
        %909 = vmatpush1.msra.mxu0 0.0
        %910 = vmatprep.subr.mxu0 0.0
        %911 = vmatpush1.msra.mxu0 0.0
        %912 = vmatprep.mubr.f32.mxu0 0.0
        %913 = vmatmul.mubr.f32.gmra.mrb[0].mxu0 %v837
        %v914 = vpop.f32.mrb[0].mxu0
        %v915 = vadd.f32 0.0, %v914
        %v916 = vpop.f32.mrb[0].mxu0
        %917 = vmatprep.mubr.f32.mxu0 0.0
        %918 = vmatmul.mubr.f32.gmra.mrb[0].mxu0 %v840
        %v919 = vpop.f32.mrb[0].mxu0
        %v920 = vadd.f32 0.0, %v919
        %v921 = vpop.f32.mrb[0].mxu0
        %922 = vmatprep.mubr.f32.mxu0 0.0
        %923 = vmatmul.mubr.f32.gmra.mrb[0].mxu0 %v843
        %v924 = vpop.f32.mrb[0].mxu0
        %v925 = vadd.f32 0.0, %v924
        %v926 = vpop.f32.mrb[0].mxu0
        %927 = vmatprep.mubr.f32.mxu0 0.0
        %928 = vmatmul.mubr.f32.gmra.mrb[0].mxu0 %v846
        %v929 = vpop.f32.mrb[0].mxu0
        %v930 = vadd.f32 0.0, %v929
        %v931 = vpop.f32.mrb[0].mxu0
        %932 = vdwg.mxu0
        %v934 = vsel %vm303, %v827, 0
        %v937 = vsel %vm303, %v826, 0
        %v940 = vsel %vm303, %v825, 0
        %v943 = vsel %vm303, %v824, 0
        %945 = vmatprep.subr.mxu0 0.0
        %946 = vmatpush1.msra.mxu0 %v418
        %947 = vmatprep.subr.mxu0 0.0
        %948 = vmatpush1.msra.mxu0 0.0
        %949 = vmatprep.subr.mxu0 0.0
        %950 = vmatpush1.msra.mxu0 0.0
        %951 = vmatprep.subr.mxu0 0.0
        %952 = vmatpush1.msra.mxu0 0.0
        %953 = vmatprep.subr.mxu0 0.0
        %954 = vmatpush1.msra.mxu0 0.0
        %955 = vmatprep.subr.mxu0 0.0
        %956 = vmatpush1.msra.mxu0 0.0
        %957 = vmatprep.subr.mxu0 0.0
        %958 = vmatpush1.msra.mxu0 0.0
        %959 = vmatprep.subr.mxu0 0.0
        %960 = vmatpush1.msra.mxu0 0.0
        %961 = vmatprep.subr.mxu0 0.0
        %962 = vmatpush1.msra.mxu0 0.0
        %963 = vmatprep.subr.mxu0 0.0
        %964 = vmatpush1.msra.mxu0 0.0
        %965 = vmatprep.subr.mxu0 0.0
        %966 = vmatpush1.msra.mxu0 0.0
        %967 = vmatprep.subr.mxu0 0.0
        %968 = vmatpush1.msra.mxu0 0.0
        %969 = vmatprep.subr.mxu0 0.0
        %970 = vmatpush1.msra.mxu0 0.0
        %971 = vmatprep.subr.mxu0 0.0
        %972 = vmatpush1.msra.mxu0 0.0
        %973 = vmatprep.subr.mxu0 0.0
        %974 = vmatpush1.msra.mxu0 0.0
        %975 = vmatprep.subr.mxu0 0.0
        %976 = vmatpush1.msra.mxu0 0.0
        %977 = vmatprep.subr.mxu0 0.0
        %978 = vmatpush1.msra.mxu0 0.0
        %979 = vmatprep.subr.mxu0 0.0
        %980 = vmatpush1.msra.mxu0 0.0
        %981 = vmatprep.subr.mxu0 0.0
        %982 = vmatpush1.msra.mxu0 0.0
        %983 = vmatprep.subr.mxu0 0.0
        %984 = vmatpush1.msra.mxu0 0.0
        %985 = vmatprep.subr.mxu0 0.0
        %986 = vmatpush1.msra.mxu0 0.0
        %987 = vmatprep.subr.mxu0 0.0
        %988 = vmatpush1.msra.mxu0 0.0
        %989 = vmatprep.subr.mxu0 0.0
        %990 = vmatpush1.msra.mxu0 0.0
        %991 = vmatprep.subr.mxu0 0.0
        %992 = vmatpush1.msra.mxu0 0.0
        %993 = vmatprep.subr.mxu0 0.0
        %994 = vmatpush1.msra.mxu0 0.0
        %995 = vmatprep.subr.mxu0 0.0
        %996 = vmatpush1.msra.mxu0 0.0
        %997 = vmatprep.subr.mxu0 0.0
        %998 = vmatpush1.msra.mxu0 0.0
        %999 = vmatprep.subr.mxu0 0.0
        %1000 = vmatpush1.msra.mxu0 0.0
        %1001 = vmatprep.subr.mxu0 0.0
        %1002 = vmatpush1.msra.mxu0 0.0
        %1003 = vmatprep.subr.mxu0 0.0
        %1004 = vmatpush1.msra.mxu0 0.0
        %1005 = vmatprep.subr.mxu0 0.0
        %1006 = vmatpush1.msra.mxu0 0.0
        %1007 = vmatprep.subr.mxu0 0.0
        %1008 = vmatpush1.msra.mxu0 0.0
        %1009 = vmatprep.mubr.f32.mxu0 0.0
        %1010 = vmatmul.mubr.f32.gmra.mrb[0].mxu0 %v934
        %v1011 = vpop.f32.mrb[0].mxu0
        %v1012 = vadd.f32 %v915, %v1011
        %v1013 = vpop.f32.mrb[0].mxu0
        %1014 = vmatprep.mubr.f32.mxu0 0.0
        %1015 = vmatmul.mubr.f32.gmra.mrb[0].mxu0 %v937
        %v1016 = vpop.f32.mrb[0].mxu0
        %v1017 = vadd.f32 %v920, %v1016
        %v1018 = vpop.f32.mrb[0].mxu0
        %1019 = vmatprep.mubr.f32.mxu0 0.0
        %1020 = vmatmul.mubr.f32.gmra.mrb[0].mxu0 %v940
        %v1021 = vpop.f32.mrb[0].mxu0
        %v1022 = vadd.f32 %v925, %v1021
        %v1023 = vpop.f32.mrb[0].mxu0
        %1024 = vmatprep.mubr.f32.mxu0 0.0
        %1025 = vmatmul.mubr.f32.gmra.mrb[0].mxu0 %v943
        %v1026 = vpop.f32.mrb[0].mxu0
        %v1027 = vadd.f32 %v930, %v1026
        %v1028 = vpop.f32.mrb[0].mxu0
        %1029 = vdwg.mxu0
        %v1031 = vsel %vm303, %v834, 0
        %v1034 = vsel %vm303, %v833, 0
        %v1037 = vsel %vm303, %v832, 0
        %v1040 = vsel %vm303, %v835, 0
        %1042 = vmatprep.subr.mxu0 0.0
        %1043 = vmatpush1.msra.mxu0 %v518
        %1044 = vmatprep.subr.mxu0 0.0
        %1045 = vmatpush1.msra.mxu0 0.0
        %1046 = vmatprep.subr.mxu0 0.0
        %1047 = vmatpush1.msra.mxu0 0.0
        %1048 = vmatprep.subr.mxu0 0.0
        %1049 = vmatpush1.msra.mxu0 0.0
        %1050 = vmatprep.subr.mxu0 0.0
        %1051 = vmatpush1.msra.mxu0 0.0
        %1052 = vmatprep.subr.mxu0 0.0
        %1053 = vmatpush1.msra.mxu0 0.0
        %1054 = vmatprep.subr.mxu0 0.0
        %1055 = vmatpush1.msra.mxu0 0.0
        %1056 = vmatprep.subr.mxu0 0.0
        %1057 = vmatpush1.msra.mxu0 0.0
        %1058 = vmatprep.subr.mxu0 0.0
        %1059 = vmatpush1.msra.mxu0 0.0
        %1060 = vmatprep.subr.mxu0 0.0
        %1061 = vmatpush1.msra.mxu0 0.0
        %1062 = vmatprep.subr.mxu0 0.0
        %1063 = vmatpush1.msra.mxu0 0.0
        %1064 = vmatprep.subr.mxu0 0.0
        %1065 = vmatpush1.msra.mxu0 0.0
        %1066 = vmatprep.subr.mxu0 0.0
        %1067 = vmatpush1.msra.mxu0 0.0
        %1068 = vmatprep.subr.mxu0 0.0
        %1069 = vmatpush1.msra.mxu0 0.0
        %1070 = vmatprep.subr.mxu0 0.0
        %1071 = vmatpush1.msra.mxu0 0.0
        %1072 = vmatprep.subr.mxu0 0.0
        %1073 = vmatpush1.msra.mxu0 0.0
        %1074 = vmatprep.subr.mxu0 0.0
        %1075 = vmatpush1.msra.mxu0 0.0
        %1076 = vmatprep.subr.mxu0 0.0
        %1077 = vmatpush1.msra.mxu0 0.0
        %1078 = vmatprep.subr.mxu0 0.0
        %1079 = vmatpush1.msra.mxu0 0.0
        %1080 = vmatprep.subr.mxu0 0.0
        %1081 = vmatpush1.msra.mxu0 0.0
        %1082 = vmatprep.subr.mxu0 0.0
        %1083 = vmatpush1.msra.mxu0 0.0
        %1084 = vmatprep.subr.mxu0 0.0
        %1085 = vmatpush1.msra.mxu0 0.0
        %1086 = vmatprep.subr.mxu0 0.0
        %1087 = vmatpush1.msra.mxu0 0.0
        %1088 = vmatprep.subr.mxu0 0.0
        %1089 = vmatpush1.msra.mxu0 0.0
        %1090 = vmatprep.subr.mxu0 0.0
        %1091 = vmatpush1.msra.mxu0 0.0
        %1092 = vmatprep.subr.mxu0 0.0
        %1093 = vmatpush1.msra.mxu0 0.0
        %1094 = vmatprep.subr.mxu0 0.0
        %1095 = vmatpush1.msra.mxu0 0.0
        %1096 = vmatprep.subr.mxu0 0.0
        %1097 = vmatpush1.msra.mxu0 0.0
        %1098 = vmatprep.subr.mxu0 0.0
        %1099 = vmatpush1.msra.mxu0 0.0
        %1100 = vmatprep.subr.mxu0 0.0
        %1101 = vmatpush1.msra.mxu0 0.0
        %1102 = vmatprep.subr.mxu0 0.0
        %1103 = vmatpush1.msra.mxu0 0.0
        %1104 = vmatprep.subr.mxu0 0.0
        %1105 = vmatpush1.msra.mxu0 0.0
        %1106 = vmatprep.mubr.f32.mxu0 0.0
        %1107 = vmatmul.mubr.f32.gmra.mrb[0].mxu0 %v1031
        %v1108 = vpop.f32.mrb[0].mxu0
        %v1109 = vadd.f32 0.0, %v1108
        %v1110 = vpop.f32.mrb[0].mxu0
        %1111 = vmatprep.mubr.f32.mxu0 0.0
        %1112 = vmatmul.mubr.f32.gmra.mrb[0].mxu0 %v1034
        %v1113 = vpop.f32.mrb[0].mxu0
        %v1114 = vadd.f32 0.0, %v1113
        %v1115 = vpop.f32.mrb[0].mxu0
        %1116 = vmatprep.mubr.f32.mxu0 0.0
        %1117 = vmatmul.mubr.f32.gmra.mrb[0].mxu0 %v1037
        %v1118 = vpop.f32.mrb[0].mxu0
        %v1119 = vadd.f32 0.0, %v1118
        %v1120 = vpop.f32.mrb[0].mxu0
        %1121 = vmatprep.mubr.f32.mxu0 0.0
        %1122 = vmatmul.mubr.f32.gmra.mrb[0].mxu0 %v1040
        %v1123 = vpop.f32.mrb[0].mxu0
        %v1124 = vadd.f32 0.0, %v1123
        %v1125 = vpop.f32.mrb[0].mxu0
        %1126 = vdwg.mxu0
        %v1127 = vadd.f32 %v1012, %v1109
        %v1128 = vadd.f32 %v1017, %v1114
        %v1129 = vadd.f32 %v1022, %v1119
        %v1130 = vadd.f32 %v1027, %v1124
        %s1131 = scalar_lea.vmem %s251, 32
        %v1132 = vld [vmem:[%s1131] sm:$0xff]
        %v1133 = vld [vmem:[%s1131 + $0x8] sm:$0xff]
        %v1134 = vld [vmem:[%s1131 + $0x10] sm:$0xff]
        %v1135 = vld [vmem:[%s1131 + $0x18] sm:$0xff]
        %1136 = vset.pattern.permute.xlu0 0
        %1137 = vperm.xlu0 %1136, %v1132
        %v1138 = vpop.permute.xlu0 %1137
        %1139 = vset.pattern.permute.xlu0 0
        %1140 = vperm.xlu0 %1139, %v1133
        %v1141 = vpop.permute.xlu0 %1140
        %1142 = vset.pattern.permute.xlu0 0
        %1143 = vperm.xlu0 %1142, %v1134
        %v1144 = vpop.permute.xlu0 %1143
        %1145 = vset.pattern.permute.xlu0 0
        %1146 = vperm.xlu0 %1145, %v1135
        %v1147 = vpop.permute.xlu0 %1146
        %vm1148 = vcmp.eq.s32.totalorder %v1138, %v274
        %vm1149 = vcmp.eq.s32.totalorder %v1141, %v274
        %vm1150 = vcmp.eq.s32.totalorder %v1144, %v274
        %vm1151 = vcmp.eq.s32.totalorder %v1147, %v274
        %1152 = vset.pattern.permute.xlu0 1
        %1153 = vperm.xlu0 %1152, %v1132
        %v1154 = vpop.permute.xlu0 %1153
        %1155 = vset.pattern.permute.xlu0 1
        %1156 = vperm.xlu0 %1155, %v1133
        %v1157 = vpop.permute.xlu0 %1156
        %1158 = vset.pattern.permute.xlu0 1
        %1159 = vperm.xlu0 %1158, %v1134
        %v1160 = vpop.permute.xlu0 %1159
        %1161 = vset.pattern.permute.xlu0 1
        %1162 = vperm.xlu0 %1161, %v1135
        %v1163 = vpop.permute.xlu0 %1162
        %vm1164 = vcmp.eq.s32.totalorder %v1154, %v274
        %vm1165 = vcmp.eq.s32.totalorder %v1157, %v274
        %vm1166 = vcmp.eq.s32.totalorder %v1160, %v274
        %vm1167 = vcmp.eq.s32.totalorder %v1163, %v274
        %vm1168 = vmor %vm1148, %vm1164
        %vm1169 = vmor %vm1149, %vm1165
        %vm1170 = vmor %vm1150, %vm1166
        %vm1171 = vmor %vm1151, %vm1167
        %1172 = vset.pattern.permute.xlu0 2
        %1173 = vperm.xlu0 %1172, %v1132
        %v1174 = vpop.permute.xlu0 %1173
        %1175 = vset.pattern.permute.xlu0 2
        %1176 = vperm.xlu0 %1175, %v1133
        %v1177 = vpop.permute.xlu0 %1176
        %1178 = vset.pattern.permute.xlu0 2
        %1179 = vperm.xlu0 %1178, %v1134
        %v1180 = vpop.permute.xlu0 %1179
        %1181 = vset.pattern.permute.xlu0 2
        %1182 = vperm.xlu0 %1181, %v1135
        %v1183 = vpop.permute.xlu0 %1182
        %vm1184 = vcmp.eq.s32.totalorder %v1174, %v274
        %vm1185 = vcmp.eq.s32.totalorder %v1177, %v274
        %vm1186 = vcmp.eq.s32.totalorder %v1180, %v274
        %vm1187 = vcmp.eq.s32.totalorder %v1183, %v274
        %vm1188 = vmor %vm1168, %vm1184
        %vm1189 = vmor %vm1169, %vm1185
        %vm1190 = vmor %vm1170, %vm1186
        %vm1191 = vmor %vm1171, %vm1187
        %1192 = vset.pattern.permute.xlu0 3
        %1193 = vperm.xlu0 %1192, %v1132
        %v1194 = vpop.permute.xlu0 %1193
        %1195 = vset.pattern.permute.xlu0 3
        %1196 = vperm.xlu0 %1195, %v1133
        %v1197 = vpop.permute.xlu0 %1196
        %1198 = vset.pattern.permute.xlu0 3
        %1199 = vperm.xlu0 %1198, %v1134
        %v1200 = vpop.permute.xlu0 %1199
        %1201 = vset.pattern.permute.xlu0 3
        %1202 = vperm.xlu0 %1201, %v1135
        %v1203 = vpop.permute.xlu0 %1202
        %vm1204 = vcmp.eq.s32.totalorder %v1194, %v274
        %vm1205 = vcmp.eq.s32.totalorder %v1197, %v274
        %vm1206 = vcmp.eq.s32.totalorder %v1200, %v274
        %vm1207 = vcmp.eq.s32.totalorder %v1203, %v274
        %vm1208 = vmor %vm1188, %vm1204
        %vm1209 = vmor %vm1189, %vm1205
        %vm1210 = vmor %vm1190, %vm1206
        %vm1211 = vmor %vm1191, %vm1207
        %v1212 = vsel %vm1208, 1, 0
        %v1213 = vsel %vm1209, 1, 0
        %v1214 = vsel %vm1210, 1, 0
        %v1215 = vsel %vm1211, 1, 0
        %v1216 = vcvt.s32.f32 %v1212
        %v1217 = vcvt.s32.f32 %v1213
        %v1218 = vcvt.s32.f32 %v1214
        %v1219 = vcvt.s32.f32 %v1215
        %v1221 = vsel %vm697, %v1216, 0
        %v1224 = vsel %vm697, %v1217, 0
        %v1227 = vsel %vm697, %v1218, 0
        %v1230 = vsel %vm697, %v1219, 0
        %1232 = vmatprep.subr.mxu0 0.0
        %1233 = vmatpush1.msra.mxu0 %v259
        %1234 = vmatprep.subr.mxu0 0.0
        %1235 = vmatpush1.msra.mxu0 %v260
        %1236 = vmatprep.subr.mxu0 0.0
        %1237 = vmatpush1.msra.mxu0 %v261
        %1238 = vmatprep.subr.mxu0 0.0
        %1239 = vmatpush1.msra.mxu0 %v262
        %1240 = vmatprep.subr.mxu0 0.0
        %1241 = vmatpush1.msra.mxu0 %v263
        %1242 = vmatprep.subr.mxu0 0.0
        %1243 = vmatpush1.msra.mxu0 %v264
        %1244 = vmatprep.subr.mxu0 0.0
        %1245 = vmatpush1.msra.mxu0 %v265
        %1246 = vmatprep.subr.mxu0 0.0
        %1247 = vmatpush1.msra.mxu0 %v266
        %1248 = vmatprep.subr.mxu0 0.0
        %1249 = vmatpush1.msra.mxu0 %v267
        %1250 = vmatprep.subr.mxu0 0.0
        %1251 = vmatpush1.msra.mxu0 %v712
        %1252 = vmatprep.subr.mxu0 0.0
        %1253 = vmatpush1.msra.mxu0 0.0
        %1254 = vmatprep.subr.mxu0 0.0
        %1255 = vmatpush1.msra.mxu0 0.0
        %1256 = vmatprep.subr.mxu0 0.0
        %1257 = vmatpush1.msra.mxu0 0.0
        %1258 = vmatprep.subr.mxu0 0.0
        %1259 = vmatpush1.msra.mxu0 0.0
        %1260 = vmatprep.subr.mxu0 0.0
        %1261 = vmatpush1.msra.mxu0 0.0
        %1262 = vmatprep.subr.mxu0 0.0
        %1263 = vmatpush1.msra.mxu0 0.0
        %1264 = vmatprep.subr.mxu0 0.0
        %1265 = vmatpush1.msra.mxu0 0.0
        %1266 = vmatprep.subr.mxu0 0.0
        %1267 = vmatpush1.msra.mxu0 0.0
        %1268 = vmatprep.subr.mxu0 0.0
        %1269 = vmatpush1.msra.mxu0 0.0
        %1270 = vmatprep.subr.mxu0 0.0
        %1271 = vmatpush1.msra.mxu0 0.0
        %1272 = vmatprep.subr.mxu0 0.0
        %1273 = vmatpush1.msra.mxu0 0.0
        %1274 = vmatprep.subr.mxu0 0.0
        %1275 = vmatpush1.msra.mxu0 0.0
        %1276 = vmatprep.subr.mxu0 0.0
        %1277 = vmatpush1.msra.mxu0 0.0
        %1278 = vmatprep.subr.mxu0 0.0
        %1279 = vmatpush1.msra.mxu0 0.0
        %1280 = vmatprep.subr.mxu0 0.0
        %1281 = vmatpush1.msra.mxu0 0.0
        %1282 = vmatprep.subr.mxu0 0.0
        %1283 = vmatpush1.msra.mxu0 0.0
        %1284 = vmatprep.subr.mxu0 0.0
        %1285 = vmatpush1.msra.mxu0 0.0
        %1286 = vmatprep.subr.mxu0 0.0
        %1287 = vmatpush1.msra.mxu0 0.0
        %1288 = vmatprep.subr.mxu0 0.0
        %1289 = vmatpush1.msra.mxu0 0.0
        %1290 = vmatprep.subr.mxu0 0.0
        %1291 = vmatpush1.msra.mxu0 0.0
        %1292 = vmatprep.subr.mxu0 0.0
        %1293 = vmatpush1.msra.mxu0 0.0
        %1294 = vmatprep.subr.mxu0 0.0
        %1295 = vmatpush1.msra.mxu0 0.0
        %1296 = vmatprep.mubr.f32.mxu0 0.0
        %1297 = vmatmul.mubr.f32.gmra.mrb[0].mxu0 %v1221
        %v1298 = vpop.f32.mrb[0].mxu0
        %v1299 = vadd.f32 0.0, %v1298
        %v1300 = vpop.f32.mrb[0].mxu0
        %1301 = vmatprep.mubr.f32.mxu0 0.0
        %1302 = vmatmul.mubr.f32.gmra.mrb[0].mxu0 %v1224
        %v1303 = vpop.f32.mrb[0].mxu0
        %v1304 = vadd.f32 0.0, %v1303
        %v1305 = vpop.f32.mrb[0].mxu0
        %1306 = vmatprep.mubr.f32.mxu0 0.0
        %1307 = vmatmul.mubr.f32.gmra.mrb[0].mxu0 %v1227
        %v1308 = vpop.f32.mrb[0].mxu0
        %v1309 = vadd.f32 0.0, %v1308
        %v1310 = vpop.f32.mrb[0].mxu0
        %1311 = vmatprep.mubr.f32.mxu0 0.0
        %1312 = vmatmul.mubr.f32.gmra.mrb[0].mxu0 %v1230
        %v1313 = vpop.f32.mrb[0].mxu0
        %v1314 = vadd.f32 0.0, %v1313
        %v1315 = vpop.f32.mrb[0].mxu0
        %1316 = vdwg.mxu0
        %v1317 = vadd.f32 %v1127, %v1299
        %v1318 = vadd.f32 %v1128, %v1304
        %v1319 = vadd.f32 %v1129, %v1309
        %v1320 = vadd.f32 %v1130, %v1314
        %v1321 = vadd.f32 %v1317, %v269
        %v1322 = vadd.f32 %v1318, %v270
        %v1323 = vadd.f32 %v1319, %v271
        %v1324 = vadd.f32 %v1320, %v272
        %s1325 = scalar_lea.vmem %s238, 32 [#allocation2]
        %1326 = vst [vmem:[%s1325] sm:$0xff] %v1321
        %1327 = vst [vmem:[%s1325 + $0x8] sm:$0xff] %v1322
        %1328 = vst [vmem:[%s1325 + $0x10] sm:$0xff] %v1323
        %1329 = vst [vmem:[%s1325 + $0x18] sm:$0xff] %v1324
        %s1330 = scalar_lea.vmem %s244, 32
        %v1331 = vld [vmem:[%s1330] sm:$0xf]
        %v1332 = vld [vmem:[%s1330 + $0x4] sm:$0xf]
        %v1333 = vld [vmem:[%s1330 + $0x8] sm:$0xf]
        %v1334 = vld [vmem:[%s1330 + $0xc] sm:$0xf]
        %v1335 = vunpack.c.l.bf16 %v1331
        %v1336 = vunpack.c.l.bf16 %v1332
        %v1337 = vunpack.c.l.bf16 %v1333
        %v1338 = vunpack.c.l.bf16 %v1334
        %v1339 = vrot.slane %v1335, 7
        %v1340 = vrot.slane %v1336, 7
        %v1341 = vrot.slane %v1337, 7
        %v1342 = vrot.slane %v1338, 7
        %v1343 = vsel %vm289, %v1341, %v1342
        %v1344 = vsel %vm289, %v1340, %v1341
        %v1345 = vsel %vm289, %v1339, %v1340
        %v1346 = vsel %vm289, %v1342, %v1339
        %v1347 = vrot.slane %v1335, 1
        %v1348 = vrot.slane %v1336, 1
        %v1349 = vrot.slane %v1337, 1
        %v1350 = vrot.slane %v1338, 1
        %v1351 = vsel %vm298, %v1349, %v1350
        %v1352 = vsel %vm298, %v1348, %v1349
        %v1353 = vsel %vm298, %v1347, %v1348
        %v1354 = vsel %vm298, %v1350, %v1347
        %v1356 = vsel %vm303, %v1335, 0
        %v1359 = vsel %vm303, %v1336, 0
        %v1362 = vsel %vm303, %v1337, 0
        %v1365 = vsel %vm303, %v1338, 0
        %1367 = vmatprep.subr.mxu0 0.0
        %1368 = vmatpush1.msra.mxu0 %v318
        %1369 = vmatprep.subr.mxu0 0.0
        %1370 = vmatpush1.msra.mxu0 0.0
        %1371 = vmatprep.subr.mxu0 0.0
        %1372 = vmatpush1.msra.mxu0 0.0
        %1373 = vmatprep.subr.mxu0 0.0
        %1374 = vmatpush1.msra.mxu0 0.0
        %1375 = vmatprep.subr.mxu0 0.0
        %1376 = vmatpush1.msra.mxu0 0.0
        %1377 = vmatprep.subr.mxu0 0.0
        %1378 = vmatpush1.msra.mxu0 0.0
        %1379 = vmatprep.subr.mxu0 0.0
        %1380 = vmatpush1.msra.mxu0 0.0
        %1381 = vmatprep.subr.mxu0 0.0
        %1382 = vmatpush1.msra.mxu0 0.0
        %1383 = vmatprep.subr.mxu0 0.0
        %1384 = vmatpush1.msra.mxu0 0.0
        %1385 = vmatprep.subr.mxu0 0.0
        %1386 = vmatpush1.msra.mxu0 0.0
        %1387 = vmatprep.subr.mxu0 0.0
        %1388 = vmatpush1.msra.mxu0 0.0
        %1389 = vmatprep.subr.mxu0 0.0
        %1390 = vmatpush1.msra.mxu0 0.0
        %1391 = vmatprep.subr.mxu0 0.0
        %1392 = vmatpush1.msra.mxu0 0.0
        %1393 = vmatprep.subr.mxu0 0.0
        %1394 = vmatpush1.msra.mxu0 0.0
        %1395 = vmatprep.subr.mxu0 0.0
        %1396 = vmatpush1.msra.mxu0 0.0
        %1397 = vmatprep.subr.mxu0 0.0
        %1398 = vmatpush1.msra.mxu0 0.0
        %1399 = vmatprep.subr.mxu0 0.0
        %1400 = vmatpush1.msra.mxu0 0.0
        %1401 = vmatprep.subr.mxu0 0.0
        %1402 = vmatpush1.msra.mxu0 0.0
        %1403 = vmatprep.subr.mxu0 0.0
        %1404 = vmatpush1.msra.mxu0 0.0
        %1405 = vmatprep.subr.mxu0 0.0
        %1406 = vmatpush1.msra.mxu0 0.0
        %1407 = vmatprep.subr.mxu0 0.0
        %1408 = vmatpush1.msra.mxu0 0.0
        %1409 = vmatprep.subr.mxu0 0.0
        %1410 = vmatpush1.msra.mxu0 0.0
        %1411 = vmatprep.subr.mxu0 0.0
        %1412 = vmatpush1.msra.mxu0 0.0
        %1413 = vmatprep.subr.mxu0 0.0
        %1414 = vmatpush1.msra.mxu0 0.0
        %1415 = vmatprep.subr.mxu0 0.0
        %1416 = vmatpush1.msra.mxu0 0.0
        %1417 = vmatprep.subr.mxu0 0.0
        %1418 = vmatpush1.msra.mxu0 0.0
        %1419 = vmatprep.subr.mxu0 0.0
        %1420 = vmatpush1.msra.mxu0 0.0
        %1421 = vmatprep.subr.mxu0 0.0
        %1422 = vmatpush1.msra.mxu0 0.0
        %1423 = vmatprep.subr.mxu0 0.0
        %1424 = vmatpush1.msra.mxu0 0.0
        %1425 = vmatprep.subr.mxu0 0.0
        %1426 = vmatpush1.msra.mxu0 0.0
        %1427 = vmatprep.subr.mxu0 0.0
        %1428 = vmatpush1.msra.mxu0 0.0
        %1429 = vmatprep.subr.mxu0 0.0
        %1430 = vmatpush1.msra.mxu0 0.0
        %1431 = vmatprep.mubr.f32.mxu0 0.0
        %1432 = vmatmul.mubr.f32.gmra.mrb[0].mxu0 %v1356
        %v1433 = vpop.f32.mrb[0].mxu0
        %v1434 = vadd.f32 0.0, %v1433
        %v1435 = vpop.f32.mrb[0].mxu0
        %1436 = vmatprep.mubr.f32.mxu0 0.0
        %1437 = vmatmul.mubr.f32.gmra.mrb[0].mxu0 %v1359
        %v1438 = vpop.f32.mrb[0].mxu0
        %v1439 = vadd.f32 0.0, %v1438
        %v1440 = vpop.f32.mrb[0].mxu0
        %1441 = vmatprep.mubr.f32.mxu0 0.0
        %1442 = vmatmul.mubr.f32.gmra.mrb[0].mxu0 %v1362
        %v1443 = vpop.f32.mrb[0].mxu0
        %v1444 = vadd.f32 0.0, %v1443
        %v1445 = vpop.f32.mrb[0].mxu0
        %1446 = vmatprep.mubr.f32.mxu0 0.0
        %1447 = vmatmul.mubr.f32.gmra.mrb[0].mxu0 %v1365
        %v1448 = vpop.f32.mrb[0].mxu0
        %v1449 = vadd.f32 0.0, %v1448
        %v1450 = vpop.f32.mrb[0].mxu0
        %1451 = vdwg.mxu0
        %v1453 = vsel %vm303, %v1346, 0
        %v1456 = vsel %vm303, %v1345, 0
        %v1459 = vsel %vm303, %v1344, 0
        %v1462 = vsel %vm303, %v1343, 0
        %1464 = vmatprep.subr.mxu0 0.0
        %1465 = vmatpush1.msra.mxu0 %v418
        %1466 = vmatprep.subr.mxu0 0.0
        %1467 = vmatpush1.msra.mxu0 0.0
        %1468 = vmatprep.subr.mxu0 0.0
        %1469 = vmatpush1.msra.mxu0 0.0
        %1470 = vmatprep.subr.mxu0 0.0
        %1471 = vmatpush1.msra.mxu0 0.0
        %1472 = vmatprep.subr.mxu0 0.0
        %1473 = vmatpush1.msra.mxu0 0.0
        %1474 = vmatprep.subr.mxu0 0.0
        %1475 = vmatpush1.msra.mxu0 0.0
        %1476 = vmatprep.subr.mxu0 0.0
        %1477 = vmatpush1.msra.mxu0 0.0
        %1478 = vmatprep.subr.mxu0 0.0
        %1479 = vmatpush1.msra.mxu0 0.0
        %1480 = vmatprep.subr.mxu0 0.0
        %1481 = vmatpush1.msra.mxu0 0.0
        %1482 = vmatprep.subr.mxu0 0.0
        %1483 = vmatpush1.msra.mxu0 0.0
        %1484 = vmatprep.subr.mxu0 0.0
        %1485 = vmatpush1.msra.mxu0 0.0
        %1486 = vmatprep.subr.mxu0 0.0
        %1487 = vmatpush1.msra.mxu0 0.0
        %1488 = vmatprep.subr.mxu0 0.0
        %1489 = vmatpush1.msra.mxu0 0.0
        %1490 = vmatprep.subr.mxu0 0.0
        %1491 = vmatpush1.msra.mxu0 0.0
        %1492 = vmatprep.subr.mxu0 0.0
        %1493 = vmatpush1.msra.mxu0 0.0
        %1494 = vmatprep.subr.mxu0 0.0
        %1495 = vmatpush1.msra.mxu0 0.0
        %1496 = vmatprep.subr.mxu0 0.0
        %1497 = vmatpush1.msra.mxu0 0.0
        %1498 = vmatprep.subr.mxu0 0.0
        %1499 = vmatpush1.msra.mxu0 0.0
        %1500 = vmatprep.subr.mxu0 0.0
        %1501 = vmatpush1.msra.mxu0 0.0
        %1502 = vmatprep.subr.mxu0 0.0
        %1503 = vmatpush1.msra.mxu0 0.0
        %1504 = vmatprep.subr.mxu0 0.0
        %1505 = vmatpush1.msra.mxu0 0.0
        %1506 = vmatprep.subr.mxu0 0.0
        %1507 = vmatpush1.msra.mxu0 0.0
        %1508 = vmatprep.subr.mxu0 0.0
        %1509 = vmatpush1.msra.mxu0 0.0
        %1510 = vmatprep.subr.mxu0 0.0
        %1511 = vmatpush1.msra.mxu0 0.0
        %1512 = vmatprep.subr.mxu0 0.0
        %1513 = vmatpush1.msra.mxu0 0.0
        %1514 = vmatprep.subr.mxu0 0.0
        %1515 = vmatpush1.msra.mxu0 0.0
        %1516 = vmatprep.subr.mxu0 0.0
        %1517 = vmatpush1.msra.mxu0 0.0
        %1518 = vmatprep.subr.mxu0 0.0
        %1519 = vmatpush1.msra.mxu0 0.0
        %1520 = vmatprep.subr.mxu0 0.0
        %1521 = vmatpush1.msra.mxu0 0.0
        %1522 = vmatprep.subr.mxu0 0.0
        %1523 = vmatpush1.msra.mxu0 0.0
        %1524 = vmatprep.subr.mxu0 0.0
        %1525 = vmatpush1.msra.mxu0 0.0
        %1526 = vmatprep.subr.mxu0 0.0
        %1527 = vmatpush1.msra.mxu0 0.0
        %1528 = vmatprep.mubr.f32.mxu0 0.0
        %1529 = vmatmul.mubr.f32.gmra.mrb[0].mxu0 %v1453
        %v1530 = vpop.f32.mrb[0].mxu0
        %v1531 = vadd.f32 %v1434, %v1530
        %v1532 = vpop.f32.mrb[0].mxu0
        %1533 = vmatprep.mubr.f32.mxu0 0.0
        %1534 = vmatmul.mubr.f32.gmra.mrb[0].mxu0 %v1456
        %v1535 = vpop.f32.mrb[0].mxu0
        %v1536 = vadd.f32 %v1439, %v1535
        %v1537 = vpop.f32.mrb[0].mxu0
        %1538 = vmatprep.mubr.f32.mxu0 0.0
        %1539 = vmatmul.mubr.f32.gmra.mrb[0].mxu0 %v1459
        %v1540 = vpop.f32.mrb[0].mxu0
        %v1541 = vadd.f32 %v1444, %v1540
        %v1542 = vpop.f32.mrb[0].mxu0
        %1543 = vmatprep.mubr.f32.mxu0 0.0
        %1544 = vmatmul.mubr.f32.gmra.mrb[0].mxu0 %v1462
        %v1545 = vpop.f32.mrb[0].mxu0
        %v1546 = vadd.f32 %v1449, %v1545
        %v1547 = vpop.f32.mrb[0].mxu0
        %1548 = vdwg.mxu0
        %v1550 = vsel %vm303, %v1353, 0
        %v1553 = vsel %vm303, %v1352, 0
        %v1556 = vsel %vm303, %v1351, 0
        %v1559 = vsel %vm303, %v1354, 0
        %1561 = vmatprep.subr.mxu0 0.0
        %1562 = vmatpush1.msra.mxu0 %v518
        %1563 = vmatprep.subr.mxu0 0.0
        %1564 = vmatpush1.msra.mxu0 0.0
        %1565 = vmatprep.subr.mxu0 0.0
        %1566 = vmatpush1.msra.mxu0 0.0
        %1567 = vmatprep.subr.mxu0 0.0
        %1568 = vmatpush1.msra.mxu0 0.0
        %1569 = vmatprep.subr.mxu0 0.0
        %1570 = vmatpush1.msra.mxu0 0.0
        %1571 = vmatprep.subr.mxu0 0.0
        %1572 = vmatpush1.msra.mxu0 0.0
        %1573 = vmatprep.subr.mxu0 0.0
        %1574 = vmatpush1.msra.mxu0 0.0
        %1575 = vmatprep.subr.mxu0 0.0
        %1576 = vmatpush1.msra.mxu0 0.0
        %1577 = vmatprep.subr.mxu0 0.0
        %1578 = vmatpush1.msra.mxu0 0.0
        %1579 = vmatprep.subr.mxu0 0.0
        %1580 = vmatpush1.msra.mxu0 0.0
        %1581 = vmatprep.subr.mxu0 0.0
        %1582 = vmatpush1.msra.mxu0 0.0
        %1583 = vmatprep.subr.mxu0 0.0
        %1584 = vmatpush1.msra.mxu0 0.0
        %1585 = vmatprep.subr.mxu0 0.0
        %1586 = vmatpush1.msra.mxu0 0.0
        %1587 = vmatprep.subr.mxu0 0.0
        %1588 = vmatpush1.msra.mxu0 0.0
        %1589 = vmatprep.subr.mxu0 0.0
        %1590 = vmatpush1.msra.mxu0 0.0
        %1591 = vmatprep.subr.mxu0 0.0
        %1592 = vmatpush1.msra.mxu0 0.0
        %1593 = vmatprep.subr.mxu0 0.0
        %1594 = vmatpush1.msra.mxu0 0.0
        %1595 = vmatprep.subr.mxu0 0.0
        %1596 = vmatpush1.msra.mxu0 0.0
        %1597 = vmatprep.subr.mxu0 0.0
        %1598 = vmatpush1.msra.mxu0 0.0
        %1599 = vmatprep.subr.mxu0 0.0
        %1600 = vmatpush1.msra.mxu0 0.0
        %1601 = vmatprep.subr.mxu0 0.0
        %1602 = vmatpush1.msra.mxu0 0.0
        %1603 = vmatprep.subr.mxu0 0.0
        %1604 = vmatpush1.msra.mxu0 0.0
        %1605 = vmatprep.subr.mxu0 0.0
        %1606 = vmatpush1.msra.mxu0 0.0
        %1607 = vmatprep.subr.mxu0 0.0
        %1608 = vmatpush1.msra.mxu0 0.0
        %1609 = vmatprep.subr.mxu0 0.0
        %1610 = vmatpush1.msra.mxu0 0.0
        %1611 = vmatprep.subr.mxu0 0.0
        %1612 = vmatpush1.msra.mxu0 0.0
        %1613 = vmatprep.subr.mxu0 0.0
        %1614 = vmatpush1.msra.mxu0 0.0
        %1615 = vmatprep.subr.mxu0 0.0
        %1616 = vmatpush1.msra.mxu0 0.0
        %1617 = vmatprep.subr.mxu0 0.0
        %1618 = vmatpush1.msra.mxu0 0.0
        %1619 = vmatprep.subr.mxu0 0.0
        %1620 = vmatpush1.msra.mxu0 0.0
        %1621 = vmatprep.subr.mxu0 0.0
        %1622 = vmatpush1.msra.mxu0 0.0
        %1623 = vmatprep.subr.mxu0 0.0
        %1624 = vmatpush1.msra.mxu0 0.0
        %1625 = vmatprep.mubr.f32.mxu0 0.0
        %1626 = vmatmul.mubr.f32.gmra.mrb[0].mxu0 %v1550
        %v1627 = vpop.f32.mrb[0].mxu0
        %v1628 = vadd.f32 0.0, %v1627
        %v1629 = vpop.f32.mrb[0].mxu0
        %1630 = vmatprep.mubr.f32.mxu0 0.0
        %1631 = vmatmul.mubr.f32.gmra.mrb[0].mxu0 %v1553
        %v1632 = vpop.f32.mrb[0].mxu0
        %v1633 = vadd.f32 0.0, %v1632
        %v1634 = vpop.f32.mrb[0].mxu0
        %1635 = vmatprep.mubr.f32.mxu0 0.0
        %1636 = vmatmul.mubr.f32.gmra.mrb[0].mxu0 %v1556
        %v1637 = vpop.f32.mrb[0].mxu0
        %v1638 = vadd.f32 0.0, %v1637
        %v1639 = vpop.f32.mrb[0].mxu0
        %1640 = vmatprep.mubr.f32.mxu0 0.0
        %1641 = vmatmul.mubr.f32.gmra.mrb[0].mxu0 %v1559
        %v1642 = vpop.f32.mrb[0].mxu0
        %v1643 = vadd.f32 0.0, %v1642
        %v1644 = vpop.f32.mrb[0].mxu0
        %1645 = vdwg.mxu0
        %v1646 = vadd.f32 %v1531, %v1628
        %v1647 = vadd.f32 %v1536, %v1633
        %v1648 = vadd.f32 %v1541, %v1638
        %v1649 = vadd.f32 %v1546, %v1643
        %s1650 = scalar_lea.vmem %s251, 64
        %v1651 = vld [vmem:[%s1650] sm:$0xff]
        %v1652 = vld [vmem:[%s1650 + $0x8] sm:$0xff]
        %v1653 = vld [vmem:[%s1650 + $0x10] sm:$0xff]
        %v1654 = vld [vmem:[%s1650 + $0x18] sm:$0xff]
        %1655 = vset.pattern.permute.xlu0 0
        %1656 = vperm.xlu0 %1655, %v1651
        %v1657 = vpop.permute.xlu0 %1656
        %1658 = vset.pattern.permute.xlu0 0
        %1659 = vperm.xlu0 %1658, %v1652
        %v1660 = vpop.permute.xlu0 %1659
        %1661 = vset.pattern.permute.xlu0 0
        %1662 = vperm.xlu0 %1661, %v1653
        %v1663 = vpop.permute.xlu0 %1662
        %1664 = vset.pattern.permute.xlu0 0
        %1665 = vperm.xlu0 %1664, %v1654
        %v1666 = vpop.permute.xlu0 %1665
        %vm1667 = vcmp.eq.s32.totalorder %v1657, %v274
        %vm1668 = vcmp.eq.s32.totalorder %v1660, %v274
        %vm1669 = vcmp.eq.s32.totalorder %v1663, %v274
        %vm1670 = vcmp.eq.s32.totalorder %v1666, %v274
        %1671 = vset.pattern.permute.xlu0 1
        %1672 = vperm.xlu0 %1671, %v1651
        %v1673 = vpop.permute.xlu0 %1672
        %1674 = vset.pattern.permute.xlu0 1
        %1675 = vperm.xlu0 %1674, %v1652
        %v1676 = vpop.permute.xlu0 %1675
        %1677 = vset.pattern.permute.xlu0 1
        %1678 = vperm.xlu0 %1677, %v1653
        %v1679 = vpop.permute.xlu0 %1678
        %1680 = vset.pattern.permute.xlu0 1
        %1681 = vperm.xlu0 %1680, %v1654
        %v1682 = vpop.permute.xlu0 %1681
        %vm1683 = vcmp.eq.s32.totalorder %v1673, %v274
        %vm1684 = vcmp.eq.s32.totalorder %v1676, %v274
        %vm1685 = vcmp.eq.s32.totalorder %v1679, %v274
        %vm1686 = vcmp.eq.s32.totalorder %v1682, %v274
        %vm1687 = vmor %vm1667, %vm1683
        %vm1688 = vmor %vm1668, %vm1684
        %vm1689 = vmor %vm1669, %vm1685
        %vm1690 = vmor %vm1670, %vm1686
        %1691 = vset.pattern.permute.xlu0 2
        %1692 = vperm.xlu0 %1691, %v1651
        %v1693 = vpop.permute.xlu0 %1692
        %1694 = vset.pattern.permute.xlu0 2
        %1695 = vperm.xlu0 %1694, %v1652
        %v1696 = vpop.permute.xlu0 %1695
        %1697 = vset.pattern.permute.xlu0 2
        %1698 = vperm.xlu0 %1697, %v1653
        %v1699 = vpop.permute.xlu0 %1698
        %1700 = vset.pattern.permute.xlu0 2
        %1701 = vperm.xlu0 %1700, %v1654
        %v1702 = vpop.permute.xlu0 %1701
        %vm1703 = vcmp.eq.s32.totalorder %v1693, %v274
        %vm1704 = vcmp.eq.s32.totalorder %v1696, %v274
        %vm1705 = vcmp.eq.s32.totalorder %v1699, %v274
        %vm1706 = vcmp.eq.s32.totalorder %v1702, %v274
        %vm1707 = vmor %vm1687, %vm1703
        %vm1708 = vmor %vm1688, %vm1704
        %vm1709 = vmor %vm1689, %vm1705
        %vm1710 = vmor %vm1690, %vm1706
        %1711 = vset.pattern.permute.xlu0 3
        %1712 = vperm.xlu0 %1711, %v1651
        %v1713 = vpop.permute.xlu0 %1712
        %1714 = vset.pattern.permute.xlu0 3
        %1715 = vperm.xlu0 %1714, %v1652
        %v1716 = vpop.permute.xlu0 %1715
        %1717 = vset.pattern.permute.xlu0 3
        %1718 = vperm.xlu0 %1717, %v1653
        %v1719 = vpop.permute.xlu0 %1718
        %1720 = vset.pattern.permute.xlu0 3
        %1721 = vperm.xlu0 %1720, %v1654
        %v1722 = vpop.permute.xlu0 %1721
        %vm1723 = vcmp.eq.s32.totalorder %v1713, %v274
        %vm1724 = vcmp.eq.s32.totalorder %v1716, %v274
        %vm1725 = vcmp.eq.s32.totalorder %v1719, %v274
        %vm1726 = vcmp.eq.s32.totalorder %v1722, %v274
        %vm1727 = vmor %vm1707, %vm1723
        %vm1728 = vmor %vm1708, %vm1724
        %vm1729 = vmor %vm1709, %vm1725
        %vm1730 = vmor %vm1710, %vm1726
        %v1731 = vsel %vm1727, 1, 0
        %v1732 = vsel %vm1728, 1, 0
        %v1733 = vsel %vm1729, 1, 0
        %v1734 = vsel %vm1730, 1, 0
        %v1735 = vcvt.s32.f32 %v1731
        %v1736 = vcvt.s32.f32 %v1732
        %v1737 = vcvt.s32.f32 %v1733
        %v1738 = vcvt.s32.f32 %v1734
        %v1740 = vsel %vm697, %v1735, 0
        %v1743 = vsel %vm697, %v1736, 0
        %v1746 = vsel %vm697, %v1737, 0
        %v1749 = vsel %vm697, %v1738, 0
        %1751 = vmatprep.subr.mxu0 0.0
        %1752 = vmatpush1.msra.mxu0 %v259
        %1753 = vmatprep.subr.mxu0 0.0
        %1754 = vmatpush1.msra.mxu0 %v260
        %1755 = vmatprep.subr.mxu0 0.0
        %1756 = vmatpush1.msra.mxu0 %v261
        %1757 = vmatprep.subr.mxu0 0.0
        %1758 = vmatpush1.msra.mxu0 %v262
        %1759 = vmatprep.subr.mxu0 0.0
        %1760 = vmatpush1.msra.mxu0 %v263
        %1761 = vmatprep.subr.mxu0 0.0
        %1762 = vmatpush1.msra.mxu0 %v264
        %1763 = vmatprep.subr.mxu0 0.0
        %1764 = vmatpush1.msra.mxu0 %v265
        %1765 = vmatprep.subr.mxu0 0.0
        %1766 = vmatpush1.msra.mxu0 %v266
        %1767 = vmatprep.subr.mxu0 0.0
        %1768 = vmatpush1.msra.mxu0 %v267
        %1769 = vmatprep.subr.mxu0 0.0
        %1770 = vmatpush1.msra.mxu0 %v712
        %1771 = vmatprep.subr.mxu0 0.0
        %1772 = vmatpush1.msra.mxu0 0.0
        %1773 = vmatprep.subr.mxu0 0.0
        %1774 = vmatpush1.msra.mxu0 0.0
        %1775 = vmatprep.subr.mxu0 0.0
        %1776 = vmatpush1.msra.mxu0 0.0
        %1777 = vmatprep.subr.mxu0 0.0
        %1778 = vmatpush1.msra.mxu0 0.0
        %1779 = vmatprep.subr.mxu0 0.0
        %1780 = vmatpush1.msra.mxu0 0.0
        %1781 = vmatprep.subr.mxu0 0.0
        %1782 = vmatpush1.msra.mxu0 0.0
        %1783 = vmatprep.subr.mxu0 0.0
        %1784 = vmatpush1.msra.mxu0 0.0
        %1785 = vmatprep.subr.mxu0 0.0
        %1786 = vmatpush1.msra.mxu0 0.0
        %1787 = vmatprep.subr.mxu0 0.0
        %1788 = vmatpush1.msra.mxu0 0.0
        %1789 = vmatprep.subr.mxu0 0.0
        %1790 = vmatpush1.msra.mxu0 0.0
        %1791 = vmatprep.subr.mxu0 0.0
        %1792 = vmatpush1.msra.mxu0 0.0
        %1793 = vmatprep.subr.mxu0 0.0
        %1794 = vmatpush1.msra.mxu0 0.0
        %1795 = vmatprep.subr.mxu0 0.0
        %1796 = vmatpush1.msra.mxu0 0.0
        %1797 = vmatprep.subr.mxu0 0.0
        %1798 = vmatpush1.msra.mxu0 0.0
        %1799 = vmatprep.subr.mxu0 0.0
        %1800 = vmatpush1.msra.mxu0 0.0
        %1801 = vmatprep.subr.mxu0 0.0
        %1802 = vmatpush1.msra.mxu0 0.0
        %1803 = vmatprep.subr.mxu0 0.0
        %1804 = vmatpush1.msra.mxu0 0.0
        %1805 = vmatprep.subr.mxu0 0.0
        %1806 = vmatpush1.msra.mxu0 0.0
        %1807 = vmatprep.subr.mxu0 0.0
        %1808 = vmatpush1.msra.mxu0 0.0
        %1809 = vmatprep.subr.mxu0 0.0
        %1810 = vmatpush1.msra.mxu0 0.0
        %1811 = vmatprep.subr.mxu0 0.0
        %1812 = vmatpush1.msra.mxu0 0.0
        %1813 = vmatprep.subr.mxu0 0.0
        %1814 = vmatpush1.msra.mxu0 0.0
        %1815 = vmatprep.mubr.f32.mxu0 0.0
        %1816 = vmatmul.mubr.f32.gmra.mrb[0].mxu0 %v1740
        %v1817 = vpop.f32.mrb[0].mxu0
        %v1818 = vadd.f32 0.0, %v1817
        %v1819 = vpop.f32.mrb[0].mxu0
        %1820 = vmatprep.mubr.f32.mxu0 0.0
        %1821 = vmatmul.mubr.f32.gmra.mrb[0].mxu0 %v1743
        %v1822 = vpop.f32.mrb[0].mxu0
        %v1823 = vadd.f32 0.0, %v1822
        %v1824 = vpop.f32.mrb[0].mxu0
        %1825 = vmatprep.mubr.f32.mxu0 0.0
        %1826 = vmatmul.mubr.f32.gmra.mrb[0].mxu0 %v1746
        %v1827 = vpop.f32.mrb[0].mxu0
        %v1828 = vadd.f32 0.0, %v1827
        %v1829 = vpop.f32.mrb[0].mxu0
        %1830 = vmatprep.mubr.f32.mxu0 0.0
        %1831 = vmatmul.mubr.f32.gmra.mrb[0].mxu0 %v1749
        %v1832 = vpop.f32.mrb[0].mxu0
        %v1833 = vadd.f32 0.0, %v1832
        %v1834 = vpop.f32.mrb[0].mxu0
        %1835 = vdwg.mxu0
        %v1836 = vadd.f32 %v1646, %v1818
        %v1837 = vadd.f32 %v1647, %v1823
        %v1838 = vadd.f32 %v1648, %v1828
        %v1839 = vadd.f32 %v1649, %v1833
        %v1840 = vadd.f32 %v1836, %v269
        %v1841 = vadd.f32 %v1837, %v270
        %v1842 = vadd.f32 %v1838, %v271
        %v1843 = vadd.f32 %v1839, %v272
        %s1844 = scalar_lea.vmem %s238, 64 [#allocation2]
        %1845 = vst [vmem:[%s1844] sm:$0xff] %v1840
        %1846 = vst [vmem:[%s1844 + $0x8] sm:$0xff] %v1841
        %1847 = vst [vmem:[%s1844 + $0x10] sm:$0xff] %v1842
        %1848 = vst [vmem:[%s1844 + $0x18] sm:$0xff] %v1843
        %s1849 = scalar_lea.vmem %s244, 48
        %v1850 = vld [vmem:[%s1849] sm:$0xf]
        %v1851 = vld [vmem:[%s1849 + $0x4] sm:$0xf]
        %v1852 = vld [vmem:[%s1849 + $0x8] sm:$0xf]
        %v1853 = vld [vmem:[%s1849 + $0xc] sm:$0xf]
        %v1854 = vunpack.c.l.bf16 %v1850
        %v1855 = vunpack.c.l.bf16 %v1851
        %v1856 = vunpack.c.l.bf16 %v1852
        %v1857 = vunpack.c.l.bf16 %v1853
        %v1858 = vrot.slane %v1854, 7
        %v1859 = vrot.slane %v1855, 7
        %v1860 = vrot.slane %v1856, 7
        %v1861 = vrot.slane %v1857, 7
        %v1862 = vsel %vm289, %v1860, %v1861
        %v1863 = vsel %vm289, %v1859, %v1860
        %v1864 = vsel %vm289, %v1858, %v1859
        %v1865 = vsel %vm289, %v1861, %v1858
        %v1866 = vrot.slane %v1854, 1
        %v1867 = vrot.slane %v1855, 1
        %v1868 = vrot.slane %v1856, 1
        %v1869 = vrot.slane %v1857, 1
        %v1870 = vsel %vm298, %v1868, %v1869
        %v1871 = vsel %vm298, %v1867, %v1868
        %v1872 = vsel %vm298, %v1866, %v1867
        %v1873 = vsel %vm298, %v1869, %v1866
        %v1875 = vsel %vm303, %v1854, 0
        %v1878 = vsel %vm303, %v1855, 0
        %v1881 = vsel %vm303, %v1856, 0
        %v1884 = vsel %vm303, %v1857, 0
        %1886 = vmatprep.subr.mxu0 0.0
        %1887 = vmatpush1.msra.mxu0 %v318
        %1888 = vmatprep.subr.mxu0 0.0
        %1889 = vmatpush1.msra.mxu0 0.0
        %1890 = vmatprep.subr.mxu0 0.0
        %1891 = vmatpush1.msra.mxu0 0.0
        %1892 = vmatprep.subr.mxu0 0.0
        %1893 = vmatpush1.msra.mxu0 0.0
        %1894 = vmatprep.subr.mxu0 0.0
        %1895 = vmatpush1.msra.mxu0 0.0
        %1896 = vmatprep.subr.mxu0 0.0
        %1897 = vmatpush1.msra.mxu0 0.0
        %1898 = vmatprep.subr.mxu0 0.0
        %1899 = vmatpush1.msra.mxu0 0.0
        %1900 = vmatprep.subr.mxu0 0.0
        %1901 = vmatpush1.msra.mxu0 0.0
        %1902 = vmatprep.subr.mxu0 0.0
        %1903 = vmatpush1.msra.mxu0 0.0
        %1904 = vmatprep.subr.mxu0 0.0
        %1905 = vmatpush1.msra.mxu0 0.0
        %1906 = vmatprep.subr.mxu0 0.0
        %1907 = vmatpush1.msra.mxu0 0.0
        %1908 = vmatprep.subr.mxu0 0.0
        %1909 = vmatpush1.msra.mxu0 0.0
        %1910 = vmatprep.subr.mxu0 0.0
        %1911 = vmatpush1.msra.mxu0 0.0
        %1912 = vmatprep.subr.mxu0 0.0
        %1913 = vmatpush1.msra.mxu0 0.0
        %1914 = vmatprep.subr.mxu0 0.0
        %1915 = vmatpush1.msra.mxu0 0.0
        %1916 = vmatprep.subr.mxu0 0.0
        %1917 = vmatpush1.msra.mxu0 0.0
        %1918 = vmatprep.subr.mxu0 0.0
        %1919 = vmatpush1.msra.mxu0 0.0
        %1920 = vmatprep.subr.mxu0 0.0
        %1921 = vmatpush1.msra.mxu0 0.0
        %1922 = vmatprep.subr.mxu0 0.0
        %1923 = vmatpush1.msra.mxu0 0.0
        %1924 = vmatprep.subr.mxu0 0.0
        %1925 = vmatpush1.msra.mxu0 0.0
        %1926 = vmatprep.subr.mxu0 0.0
        %1927 = vmatpush1.msra.mxu0 0.0
        %1928 = vmatprep.subr.mxu0 0.0
        %1929 = vmatpush1.msra.mxu0 0.0
        %1930 = vmatprep.subr.mxu0 0.0
        %1931 = vmatpush1.msra.mxu0 0.0
        %1932 = vmatprep.subr.mxu0 0.0
        %1933 = vmatpush1.msra.mxu0 0.0
        %1934 = vmatprep.subr.mxu0 0.0
        %1935 = vmatpush1.msra.mxu0 0.0
        %1936 = vmatprep.subr.mxu0 0.0
        %1937 = vmatpush1.msra.mxu0 0.0
        %1938 = vmatprep.subr.mxu0 0.0
        %1939 = vmatpush1.msra.mxu0 0.0
        %1940 = vmatprep.subr.mxu0 0.0
        %1941 = vmatpush1.msra.mxu0 0.0
        %1942 = vmatprep.subr.mxu0 0.0
        %1943 = vmatpush1.msra.mxu0 0.0
        %1944 = vmatprep.subr.mxu0 0.0
        %1945 = vmatpush1.msra.mxu0 0.0
        %1946 = vmatprep.subr.mxu0 0.0
        %1947 = vmatpush1.msra.mxu0 0.0
        %1948 = vmatprep.subr.mxu0 0.0
        %1949 = vmatpush1.msra.mxu0 0.0
        %1950 = vmatprep.mubr.f32.mxu0 0.0
        %1951 = vmatmul.mubr.f32.gmra.mrb[0].mxu0 %v1875
        %v1952 = vpop.f32.mrb[0].mxu0
        %v1953 = vadd.f32 0.0, %v1952
        %v1954 = vpop.f32.mrb[0].mxu0
        %1955 = vmatprep.mubr.f32.mxu0 0.0
        %1956 = vmatmul.mubr.f32.gmra.mrb[0].mxu0 %v1878
        %v1957 = vpop.f32.mrb[0].mxu0
        %v1958 = vadd.f32 0.0, %v1957
        %v1959 = vpop.f32.mrb[0].mxu0
        %1960 = vmatprep.mubr.f32.mxu0 0.0
        %1961 = vmatmul.mubr.f32.gmra.mrb[0].mxu0 %v1881
        %v1962 = vpop.f32.mrb[0].mxu0
        %v1963 = vadd.f32 0.0, %v1962
        %v1964 = vpop.f32.mrb[0].mxu0
        %1965 = vmatprep.mubr.f32.mxu0 0.0
        %1966 = vmatmul.mubr.f32.gmra.mrb[0].mxu0 %v1884
        %v1967 = vpop.f32.mrb[0].mxu0
        %v1968 = vadd.f32 0.0, %v1967
        %v1969 = vpop.f32.mrb[0].mxu0
        %1970 = vdwg.mxu0
        %v1972 = vsel %vm303, %v1865, 0
        %v1975 = vsel %vm303, %v1864, 0
        %v1978 = vsel %vm303, %v1863, 0
        %v1981 = vsel %vm303, %v1862, 0
        %1983 = vmatprep.subr.mxu0 0.0
        %1984 = vmatpush1.msra.mxu0 %v418
        %1985 = vmatprep.subr.mxu0 0.0
        %1986 = vmatpush1.msra.mxu0 0.0
        %1987 = vmatprep.subr.mxu0 0.0
        %1988 = vmatpush1.msra.mxu0 0.0
        %1989 = vmatprep.subr.mxu0 0.0
        %1990 = vmatpush1.msra.mxu0 0.0
        %1991 = vmatprep.subr.mxu0 0.0
        %1992 = vmatpush1.msra.mxu0 0.0
        %1993 = vmatprep.subr.mxu0 0.0
        %1994 = vmatpush1.msra.mxu0 0.0
        %1995 = vmatprep.subr.mxu0 0.0
        %1996 = vmatpush1.msra.mxu0 0.0
        %1997 = vmatprep.subr.mxu0 0.0
        %1998 = vmatpush1.msra.mxu0 0.0
        %1999 = vmatprep.subr.mxu0 0.0
        %2000 = vmatpush1.msra.mxu0 0.0
        %2001 = vmatprep.subr.mxu0 0.0
        %2002 = vmatpush1.msra.mxu0 0.0
        %2003 = vmatprep.subr.mxu0 0.0
        %2004 = vmatpush1.msra.mxu0 0.0
        %2005 = vmatprep.subr.mxu0 0.0
        %2006 = vmatpush1.msra.mxu0 0.0
        %2007 = vmatprep.subr.mxu0 0.0
        %2008 = vmatpush1.msra.mxu0 0.0
        %2009 = vmatprep.subr.mxu0 0.0
        %2010 = vmatpush1.msra.mxu0 0.0
        %2011 = vmatprep.subr.mxu0 0.0
        %2012 = vmatpush1.msra.mxu0 0.0
        %2013 = vmatprep.subr.mxu0 0.0
        %2014 = vmatpush1.msra.mxu0 0.0
        %2015 = vmatprep.subr.mxu0 0.0
        %2016 = vmatpush1.msra.mxu0 0.0
        %2017 = vmatprep.subr.mxu0 0.0
        %2018 = vmatpush1.msra.mxu0 0.0
        %2019 = vmatprep.subr.mxu0 0.0
        %2020 = vmatpush1.msra.mxu0 0.0
        %2021 = vmatprep.subr.mxu0 0.0
        %2022 = vmatpush1.msra.mxu0 0.0
        %2023 = vmatprep.subr.mxu0 0.0
        %2024 = vmatpush1.msra.mxu0 0.0
        %2025 = vmatprep.subr.mxu0 0.0
        %2026 = vmatpush1.msra.mxu0 0.0
        %2027 = vmatprep.subr.mxu0 0.0
        %2028 = vmatpush1.msra.mxu0 0.0
        %2029 = vmatprep.subr.mxu0 0.0
        %2030 = vmatpush1.msra.mxu0 0.0
        %2031 = vmatprep.subr.mxu0 0.0
        %2032 = vmatpush1.msra.mxu0 0.0
        %2033 = vmatprep.subr.mxu0 0.0
        %2034 = vmatpush1.msra.mxu0 0.0
        %2035 = vmatprep.subr.mxu0 0.0
        %2036 = vmatpush1.msra.mxu0 0.0
        %2037 = vmatprep.subr.mxu0 0.0
        %2038 = vmatpush1.msra.mxu0 0.0
        %2039 = vmatprep.subr.mxu0 0.0
        %2040 = vmatpush1.msra.mxu0 0.0
        %2041 = vmatprep.subr.mxu0 0.0
        %2042 = vmatpush1.msra.mxu0 0.0
        %2043 = vmatprep.subr.mxu0 0.0
        %2044 = vmatpush1.msra.mxu0 0.0
        %2045 = vmatprep.subr.mxu0 0.0
        %2046 = vmatpush1.msra.mxu0 0.0
        %2047 = vmatprep.mubr.f32.mxu0 0.0
        %2048 = vmatmul.mubr.f32.gmra.mrb[0].mxu0 %v1972
        %v2049 = vpop.f32.mrb[0].mxu0
        %v2050 = vadd.f32 %v1953, %v2049
        %v2051 = vpop.f32.mrb[0].mxu0
        %2052 = vmatprep.mubr.f32.mxu0 0.0
        %2053 = vmatmul.mubr.f32.gmra.mrb[0].mxu0 %v1975
        %v2054 = vpop.f32.mrb[0].mxu0
        %v2055 = vadd.f32 %v1958, %v2054
        %v2056 = vpop.f32.mrb[0].mxu0
        %2057 = vmatprep.mubr.f32.mxu0 0.0
        %2058 = vmatmul.mubr.f32.gmra.mrb[0].mxu0 %v1978
        %v2059 = vpop.f32.mrb[0].mxu0
        %v2060 = vadd.f32 %v1963, %v2059
        %v2061 = vpop.f32.mrb[0].mxu0
        %2062 = vmatprep.mubr.f32.mxu0 0.0
        %2063 = vmatmul.mubr.f32.gmra.mrb[0].mxu0 %v1981
        %v2064 = vpop.f32.mrb[0].mxu0
        %v2065 = vadd.f32 %v1968, %v2064
        %v2066 = vpop.f32.mrb[0].mxu0
        %2067 = vdwg.mxu0
        %v2069 = vsel %vm303, %v1872, 0
        %v2072 = vsel %vm303, %v1871, 0
        %v2075 = vsel %vm303, %v1870, 0
        %v2078 = vsel %vm303, %v1873, 0
        %2080 = vmatprep.subr.mxu0 0.0
        %2081 = vmatpush1.msra.mxu0 %v518
        %2082 = vmatprep.subr.mxu0 0.0
        %2083 = vmatpush1.msra.mxu0 0.0
        %2084 = vmatprep.subr.mxu0 0.0
        %2085 = vmatpush1.msra.mxu0 0.0
        %2086 = vmatprep.subr.mxu0 0.0
        %2087 = vmatpush1.msra.mxu0 0.0
        %2088 = vmatprep.subr.mxu0 0.0
        %2089 = vmatpush1.msra.mxu0 0.0
        %2090 = vmatprep.subr.mxu0 0.0
        %2091 = vmatpush1.msra.mxu0 0.0
        %2092 = vmatprep.subr.mxu0 0.0
        %2093 = vmatpush1.msra.mxu0 0.0
        %2094 = vmatprep.subr.mxu0 0.0
        %2095 = vmatpush1.msra.mxu0 0.0
        %2096 = vmatprep.subr.mxu0 0.0
        %2097 = vmatpush1.msra.mxu0 0.0
        %2098 = vmatprep.subr.mxu0 0.0
        %2099 = vmatpush1.msra.mxu0 0.0
        %2100 = vmatprep.subr.mxu0 0.0
        %2101 = vmatpush1.msra.mxu0 0.0
        %2102 = vmatprep.subr.mxu0 0.0
        %2103 = vmatpush1.msra.mxu0 0.0
        %2104 = vmatprep.subr.mxu0 0.0
        %2105 = vmatpush1.msra.mxu0 0.0
        %2106 = vmatprep.subr.mxu0 0.0
        %2107 = vmatpush1.msra.mxu0 0.0
        %2108 = vmatprep.subr.mxu0 0.0
        %2109 = vmatpush1.msra.mxu0 0.0
        %2110 = vmatprep.subr.mxu0 0.0
        %2111 = vmatpush1.msra.mxu0 0.0
        %2112 = vmatprep.subr.mxu0 0.0
        %2113 = vmatpush1.msra.mxu0 0.0
        %2114 = vmatprep.subr.mxu0 0.0
        %2115 = vmatpush1.msra.mxu0 0.0
        %2116 = vmatprep.subr.mxu0 0.0
        %2117 = vmatpush1.msra.mxu0 0.0
        %2118 = vmatprep.subr.mxu0 0.0
        %2119 = vmatpush1.msra.mxu0 0.0
        %2120 = vmatprep.subr.mxu0 0.0
        %2121 = vmatpush1.msra.mxu0 0.0
        %2122 = vmatprep.subr.mxu0 0.0
        %2123 = vmatpush1.msra.mxu0 0.0
        %2124 = vmatprep.subr.mxu0 0.0
        %2125 = vmatpush1.msra.mxu0 0.0
        %2126 = vmatprep.subr.mxu0 0.0
        %2127 = vmatpush1.msra.mxu0 0.0
        %2128 = vmatprep.subr.mxu0 0.0
        %2129 = vmatpush1.msra.mxu0 0.0
        %2130 = vmatprep.subr.mxu0 0.0
        %2131 = vmatpush1.msra.mxu0 0.0
        %2132 = vmatprep.subr.mxu0 0.0
        %2133 = vmatpush1.msra.mxu0 0.0
        %2134 = vmatprep.subr.mxu0 0.0
        %2135 = vmatpush1.msra.mxu0 0.0
        %2136 = vmatprep.subr.mxu0 0.0
        %2137 = vmatpush1.msra.mxu0 0.0
        %2138 = vmatprep.subr.mxu0 0.0
        %2139 = vmatpush1.msra.mxu0 0.0
        %2140 = vmatprep.subr.mxu0 0.0
        %2141 = vmatpush1.msra.mxu0 0.0
        %2142 = vmatprep.subr.mxu0 0.0
        %2143 = vmatpush1.msra.mxu0 0.0
        %2144 = vmatprep.mubr.f32.mxu0 0.0
        %2145 = vmatmul.mubr.f32.gmra.mrb[0].mxu0 %v2069
        %v2146 = vpop.f32.mrb[0].mxu0
        %v2147 = vadd.f32 0.0, %v2146
        %v2148 = vpop.f32.mrb[0].mxu0
        %2149 = vmatprep.mubr.f32.mxu0 0.0
        %2150 = vmatmul.mubr.f32.gmra.mrb[0].mxu0 %v2072
        %v2151 = vpop.f32.mrb[0].mxu0
        %v2152 = vadd.f32 0.0, %v2151
        %v2153 = vpop.f32.mrb[0].mxu0
        %2154 = vmatprep.mubr.f32.mxu0 0.0
        %2155 = vmatmul.mubr.f32.gmra.mrb[0].mxu0 %v2075
        %v2156 = vpop.f32.mrb[0].mxu0
        %v2157 = vadd.f32 0.0, %v2156
        %v2158 = vpop.f32.mrb[0].mxu0
        %2159 = vmatprep.mubr.f32.mxu0 0.0
        %2160 = vmatmul.mubr.f32.gmra.mrb[0].mxu0 %v2078
        %v2161 = vpop.f32.mrb[0].mxu0
        %v2162 = vadd.f32 0.0, %v2161
        %v2163 = vpop.f32.mrb[0].mxu0
        %2164 = vdwg.mxu0
        %v2165 = vadd.f32 %v2050, %v2147
        %v2166 = vadd.f32 %v2055, %v2152
        %v2167 = vadd.f32 %v2060, %v2157
        %v2168 = vadd.f32 %v2065, %v2162
        %s2169 = scalar_lea.vmem %s251, 96
        %v2170 = vld [vmem:[%s2169] sm:$0xff]
        %v2171 = vld [vmem:[%s2169 + $0x8] sm:$0xff]
        %v2172 = vld [vmem:[%s2169 + $0x10] sm:$0xff]
        %v2173 = vld [vmem:[%s2169 + $0x18] sm:$0xff]
        %2174 = vset.pattern.permute.xlu0 0
        %2175 = vperm.xlu0 %2174, %v2170
        %v2176 = vpop.permute.xlu0 %2175
        %2177 = vset.pattern.permute.xlu0 0
        %2178 = vperm.xlu0 %2177, %v2171
        %v2179 = vpop.permute.xlu0 %2178
        %2180 = vset.pattern.permute.xlu0 0
        %2181 = vperm.xlu0 %2180, %v2172
        %v2182 = vpop.permute.xlu0 %2181
        %2183 = vset.pattern.permute.xlu0 0
        %2184 = vperm.xlu0 %2183, %v2173
        %v2185 = vpop.permute.xlu0 %2184
        %vm2186 = vcmp.eq.s32.totalorder %v2176, %v274
        %vm2187 = vcmp.eq.s32.totalorder %v2179, %v274
        %vm2188 = vcmp.eq.s32.totalorder %v2182, %v274
        %vm2189 = vcmp.eq.s32.totalorder %v2185, %v274
        %2190 = vset.pattern.permute.xlu0 1
        %2191 = vperm.xlu0 %2190, %v2170
        %v2192 = vpop.permute.xlu0 %2191
        %2193 = vset.pattern.permute.xlu0 1
        %2194 = vperm.xlu0 %2193, %v2171
        %v2195 = vpop.permute.xlu0 %2194
        %2196 = vset.pattern.permute.xlu0 1
        %2197 = vperm.xlu0 %2196, %v2172
        %v2198 = vpop.permute.xlu0 %2197
        %2199 = vset.pattern.permute.xlu0 1
        %2200 = vperm.xlu0 %2199, %v2173
        %v2201 = vpop.permute.xlu0 %2200
        %vm2202 = vcmp.eq.s32.totalorder %v2192, %v274
        %vm2203 = vcmp.eq.s32.totalorder %v2195, %v274
        %vm2204 = vcmp.eq.s32.totalorder %v2198, %v274
        %vm2205 = vcmp.eq.s32.totalorder %v2201, %v274
        %vm2206 = vmor %vm2186, %vm2202
        %vm2207 = vmor %vm2187, %vm2203
        %vm2208 = vmor %vm2188, %vm2204
        %vm2209 = vmor %vm2189, %vm2205
        %2210 = vset.pattern.permute.xlu0 2
        %2211 = vperm.xlu0 %2210, %v2170
        %v2212 = vpop.permute.xlu0 %2211
        %2213 = vset.pattern.permute.xlu0 2
        %2214 = vperm.xlu0 %2213, %v2171
        %v2215 = vpop.permute.xlu0 %2214
        %2216 = vset.pattern.permute.xlu0 2
        %2217 = vperm.xlu0 %2216, %v2172
        %v2218 = vpop.permute.xlu0 %2217
        %2219 = vset.pattern.permute.xlu0 2
        %2220 = vperm.xlu0 %2219, %v2173
        %v2221 = vpop.permute.xlu0 %2220
        %vm2222 = vcmp.eq.s32.totalorder %v2212, %v274
        %vm2223 = vcmp.eq.s32.totalorder %v2215, %v274
        %vm2224 = vcmp.eq.s32.totalorder %v2218, %v274
        %vm2225 = vcmp.eq.s32.totalorder %v2221, %v274
        %vm2226 = vmor %vm2206, %vm2222
        %vm2227 = vmor %vm2207, %vm2223
        %vm2228 = vmor %vm2208, %vm2224
        %vm2229 = vmor %vm2209, %vm2225
        %2230 = vset.pattern.permute.xlu0 3
        %2231 = vperm.xlu0 %2230, %v2170
        %v2232 = vpop.permute.xlu0 %2231
        %2233 = vset.pattern.permute.xlu0 3
        %2234 = vperm.xlu0 %2233, %v2171
        %v2235 = vpop.permute.xlu0 %2234
        %2236 = vset.pattern.permute.xlu0 3
        %2237 = vperm.xlu0 %2236, %v2172
        %v2238 = vpop.permute.xlu0 %2237
        %2239 = vset.pattern.permute.xlu0 3
        %2240 = vperm.xlu0 %2239, %v2173
        %v2241 = vpop.permute.xlu0 %2240
        %vm2242 = vcmp.eq.s32.totalorder %v2232, %v274
        %vm2243 = vcmp.eq.s32.totalorder %v2235, %v274
        %vm2244 = vcmp.eq.s32.totalorder %v2238, %v274
        %vm2245 = vcmp.eq.s32.totalorder %v2241, %v274
        %vm2246 = vmor %vm2226, %vm2242
        %vm2247 = vmor %vm2227, %vm2243
        %vm2248 = vmor %vm2228, %vm2244
        %vm2249 = vmor %vm2229, %vm2245
        %v2250 = vsel %vm2246, 1, 0
        %v2251 = vsel %vm2247, 1, 0
        %v2252 = vsel %vm2248, 1, 0
        %v2253 = vsel %vm2249, 1, 0
        %v2254 = vcvt.s32.f32 %v2250
        %v2255 = vcvt.s32.f32 %v2251
        %v2256 = vcvt.s32.f32 %v2252
        %v2257 = vcvt.s32.f32 %v2253
        %v2259 = vsel %vm697, %v2254, 0
        %v2262 = vsel %vm697, %v2255, 0
        %v2265 = vsel %vm697, %v2256, 0
        %v2268 = vsel %vm697, %v2257, 0
        %2270 = vmatprep.subr.mxu0 0.0
        %2271 = vmatpush1.msra.mxu0 %v259
        %2272 = vmatprep.subr.mxu0 0.0
        %2273 = vmatpush1.msra.mxu0 %v260
        %2274 = vmatprep.subr.mxu0 0.0
        %2275 = vmatpush1.msra.mxu0 %v261
        %2276 = vmatprep.subr.mxu0 0.0
        %2277 = vmatpush1.msra.mxu0 %v262
        %2278 = vmatprep.subr.mxu0 0.0
        %2279 = vmatpush1.msra.mxu0 %v263
        %2280 = vmatprep.subr.mxu0 0.0
        %2281 = vmatpush1.msra.mxu0 %v264
        %2282 = vmatprep.subr.mxu0 0.0
        %2283 = vmatpush1.msra.mxu0 %v265
        %2284 = vmatprep.subr.mxu0 0.0
        %2285 = vmatpush1.msra.mxu0 %v266
        %2286 = vmatprep.subr.mxu0 0.0
        %2287 = vmatpush1.msra.mxu0 %v267
        %2288 = vmatprep.subr.mxu0 0.0
        %2289 = vmatpush1.msra.mxu0 %v712
        %2290 = vmatprep.subr.mxu0 0.0
        %2291 = vmatpush1.msra.mxu0 0.0
        %2292 = vmatprep.subr.mxu0 0.0
        %2293 = vmatpush1.msra.mxu0 0.0
        %2294 = vmatprep.subr.mxu0 0.0
        %2295 = vmatpush1.msra.mxu0 0.0
        %2296 = vmatprep.subr.mxu0 0.0
        %2297 = vmatpush1.msra.mxu0 0.0
        %2298 = vmatprep.subr.mxu0 0.0
        %2299 = vmatpush1.msra.mxu0 0.0
        %2300 = vmatprep.subr.mxu0 0.0
        %2301 = vmatpush1.msra.mxu0 0.0
        %2302 = vmatprep.subr.mxu0 0.0
        %2303 = vmatpush1.msra.mxu0 0.0
        %2304 = vmatprep.subr.mxu0 0.0
        %2305 = vmatpush1.msra.mxu0 0.0
        %2306 = vmatprep.subr.mxu0 0.0
        %2307 = vmatpush1.msra.mxu0 0.0
        %2308 = vmatprep.subr.mxu0 0.0
        %2309 = vmatpush1.msra.mxu0 0.0
        %2310 = vmatprep.subr.mxu0 0.0
        %2311 = vmatpush1.msra.mxu0 0.0
        %2312 = vmatprep.subr.mxu0 0.0
        %2313 = vmatpush1.msra.mxu0 0.0
        %2314 = vmatprep.subr.mxu0 0.0
        %2315 = vmatpush1.msra.mxu0 0.0
        %2316 = vmatprep.subr.mxu0 0.0
        %2317 = vmatpush1.msra.mxu0 0.0
        %2318 = vmatprep.subr.mxu0 0.0
        %2319 = vmatpush1.msra.mxu0 0.0
        %2320 = vmatprep.subr.mxu0 0.0
        %2321 = vmatpush1.msra.mxu0 0.0
        %2322 = vmatprep.subr.mxu0 0.0
        %2323 = vmatpush1.msra.mxu0 0.0
        %2324 = vmatprep.subr.mxu0 0.0
        %2325 = vmatpush1.msra.mxu0 0.0
        %2326 = vmatprep.subr.mxu0 0.0
        %2327 = vmatpush1.msra.mxu0 0.0
        %2328 = vmatprep.subr.mxu0 0.0
        %2329 = vmatpush1.msra.mxu0 0.0
        %2330 = vmatprep.subr.mxu0 0.0
        %2331 = vmatpush1.msra.mxu0 0.0
        %2332 = vmatprep.subr.mxu0 0.0
        %2333 = vmatpush1.msra.mxu0 0.0
        %2334 = vmatprep.mubr.f32.mxu0 0.0
        %2335 = vmatmul.mubr.f32.gmra.mrb[0].mxu0 %v2259
        %v2336 = vpop.f32.mrb[0].mxu0
        %v2337 = vadd.f32 0.0, %v2336
        %v2338 = vpop.f32.mrb[0].mxu0
        %2339 = vmatprep.mubr.f32.mxu0 0.0
        %2340 = vmatmul.mubr.f32.gmra.mrb[0].mxu0 %v2262
        %v2341 = vpop.f32.mrb[0].mxu0
        %v2342 = vadd.f32 0.0, %v2341
        %v2343 = vpop.f32.mrb[0].mxu0
        %2344 = vmatprep.mubr.f32.mxu0 0.0
        %2345 = vmatmul.mubr.f32.gmra.mrb[0].mxu0 %v2265
        %v2346 = vpop.f32.mrb[0].mxu0
        %v2347 = vadd.f32 0.0, %v2346
        %v2348 = vpop.f32.mrb[0].mxu0
        %2349 = vmatprep.mubr.f32.mxu0 0.0
        %2350 = vmatmul.mubr.f32.gmra.mrb[0].mxu0 %v2268
        %v2351 = vpop.f32.mrb[0].mxu0
        %v2352 = vadd.f32 0.0, %v2351
        %v2353 = vpop.f32.mrb[0].mxu0
        %2354 = vdwg.mxu0
        %v2355 = vadd.f32 %v2165, %v2337
        %v2356 = vadd.f32 %v2166, %v2342
        %v2357 = vadd.f32 %v2167, %v2347
        %v2358 = vadd.f32 %v2168, %v2352
        %v2359 = vadd.f32 %v2355, %v269
        %v2360 = vadd.f32 %v2356, %v270
        %v2361 = vadd.f32 %v2357, %v271
        %v2362 = vadd.f32 %v2358, %v272
        %s2363 = scalar_lea.vmem %s238, 96 [#allocation2]
        %2364 = vst [vmem:[%s2363] sm:$0xff] %v2359
        %2365 = vst [vmem:[%s2363 + $0x8] sm:$0xff] %v2360
        %2366 = vst [vmem:[%s2363 + $0x10] sm:$0xff] %v2361
        %2367 = vst [vmem:[%s2363 + $0x18] sm:$0xff] %v2362
        %s2368 = sand.u32 %s142, 1
        %s2369 = scalar_lea.sflag [#allocation3], %s2368
        %s2370 = sand.u32 %s142, 1
        %s2371 = smul.addr %s2370, 128
        %s2372 = scalar_lea.vmem [#allocation2], %s2371
        // Predicated region
        $region41: #{tpu_custom_call.1} parent=39 // pred_check
          %p2373 = pneg %p152
        $region42: #{tpu_custom_call.1} parent=39 // pred_check_branch
          %2375 = sbr.rel (%p2373) target = $region44
        $region43: #{tpu_custom_call.1} parent=39 // pred_region
          %s2376 = smul.u32 4, %s19
          %s2378 = ssub.s32 2048, 2048
          %2379 = vsyncadd %s2369, %s2378
          %s2380 = smul.addr %s2376, 4
          %s2381 = smul.addr %s2380, 128
          %s2382 = scalar_lea.hbm %s5, %s2381
          %s2383 = sshll.u32 %s2372, 4
          %s2384 = int_to_ptr.vmem [resolvable:$true] %s2383
          %2389 = dma.vmem_to_hbm [thread:$0]  %s2384, 2048, %s2382, %s2369, 128, 128, 8
        $region44: #{tpu_custom_call.1} parent=39 // pred_fallthru
          _
      $region40: #{tpu_custom_call.1} parent=5 // pred_fallthru
        _
      %p2390 = scmp.le.s32.totalorder 2, %s14
      // Predicated region
      $region45: #{tpu_custom_call.1} parent=5 // pred_check
        %p2391 = pneg %p2390
      $region46: #{tpu_custom_call.1} parent=5 // pred_check_branch
        %2393 = sbr.rel (%p2391) target = $region48
      $region47: #{tpu_custom_call.1} parent=5 // pred_region
        %s2394 = ssub.s32 %s14, 2
        // Predicated region
        $region49: #{tpu_custom_call.1} parent=47 // pred_check
          %p2395 = pneg %p158
        $region50: #{tpu_custom_call.1} parent=47 // pred_check_branch
          %2397 = sbr.rel (%p2395) target = $region52
        $region51: #{tpu_custom_call.1} parent=47 // pred_region
          %s2398 = sand.u32 %s143, 1
          %s2399 = scalar_lea.sflag [#allocation3], %s2398
          %s2400 = sand.u32 %s143, 1
          %s2401 = smul.addr %s2400, 128
          %s2402 = scalar_lea.vmem [#allocation2], %s2401
          %2403 = dma.done %s2399, 2048
        $region52: #{tpu_custom_call.1} parent=47 // pred_fallthru
          _
      $region48: #{tpu_custom_call.1} parent=5 // pred_fallthru
        _
    $region6: #{tpu_custom_call.1} parent=1 // loop_footer
      %s18 = sadd.s32 1, %s14
    $region7: #{tpu_custom_call.1} parent=1 // loop_footer_branch
      %13 = sbr.rel target = $region3
    $region8: #{tpu_custom_call.1} parent=1 // loop_exit
      _
    %2404 = vsyncpa [#allocation3], 1
    %s2405 = scalar_lea.sflag [#allocation3], 1
    %2406 = vsyncpa %s2405, 1

</llo_original>
